<compile_context>
chip_gen: v5e
topology: v5e:2x2
jax: 0.10.0
libtpu: 0.0.40
codegen_flags: <defaults>
</compile_context>

<pallas_src>
import functools

import jax
import jax.numpy as jnp
from jax.experimental import pallas as pl
from jax.experimental.pallas import tpu as pltpu

SELU_ALPHA = 1.6732632423543772
SELU_SCALE = 1.0507009873554805

TB_MAX = 512     # max batch rows per grid step (review: 512-1024 sweet spot)
_SUBLANE = 8     # batch tiles must be a multiple of 8 rows (f32/bf16 sublanes)


def _round_up(n, m):
    return ((n + m - 1) // m) * m


def _is_pre_v6():
    """True on v5e/v5p/v4/... whose VPU/EUP have no native bf16 elementwise."""
    try:
        kind = jax.devices()[0].device_kind.lower()
    except Exception:
        return True
    return any(tag in kind for tag in ("v2", "v3", "v4", "v5"))


def _elementwise_dtype():
    # bf16 SELU/sigmoid on v6e/v7x (halves the saturating VALU/EUP bundles);
    # f32 on v5e and older, where bf16 elementwise would be emulated (slower).
    return jnp.float32 if _is_pre_v6() else jnp.bfloat16


def _selu_ref(x):
    return SELU_SCALE * jnp.where(x > 0, x, SELU_ALPHA * (jnp.exp(x) - 1.0))


def _make_kernel(ew_dtype):
    """Fused encoder+decoder forward over one (TB, in_pad) batch tile."""

    def kernel(x_ref,
               we1_ref, be1_ref, we2_ref, be2_ref, we3_ref, be3_ref,
               wd3_ref, bd3_ref, wd4_ref, bd4_ref, wd5_ref, bd5_ref,
               out_ref, code_ref):

        def dense(h, w_ref, b_ref):
            # bf16 operands on the MXU, f32 accumulation, f32 bias add.
            return (jnp.dot(h.astype(jnp.bfloat16), w_ref[...],
                            preferred_element_type=jnp.float32)
                    + b_ref[...])

        def selu(a_f32):
            a = a_f32.astype(ew_dtype)
            # exp() of the discarded (a > 0) branch may overflow; jnp.where
            # drops it, so the forward value is exact.  (Would need
            # jnp.exp(jnp.minimum(a, 0)) if this kernel were differentiated.)
            return SELU_SCALE * jnp.where(a > 0, a,
                                          SELU_ALPHA * (jnp.exp(a) - 1.0))

        x = x_ref[...]                                 # (TB, in_pad) bf16

        # ---- encoder ----
        h = selu(dense(x, we1_ref, be1_ref))
        h = selu(dense(h, we2_ref, be2_ref))
        c = dense(h, we3_ref, be3_ref)                 # f32 code
        code_ref[...] = c.astype(code_ref.dtype)       # bf16 store (lane-dense)

        # ---- decoder ----
        # TODO(synk): optionally pre-fuse e3->d3 (Wd3' = We3 @ Wd3) to shorten
        # the serial MXU chain; skipped to keep semantics transparent.
        d = selu(dense(c, wd3_ref, bd3_ref))
        d = selu(dense(d, wd4_ref, bd4_ref))
        d = dense(d, wd5_ref, bd5_ref)                 # f32 logits
        # sigmoid(d) = 1 / (1 + exp(-d)): exp + approx reciprocal on the EUP.
        out_ref[...] = pl.reciprocal(1.0 + jnp.exp(-d),
                                     approx=True).astype(out_ref.dtype)

    return kernel


def init_params(key, in_dim, hid_dim, dtype=jnp.float32):
    """PyTorch-style uniform(+/- 1/sqrt(fan_in)) init for the 6 live layers.

    Weights are stored as (in_features, out_features) for `x @ W + b`."""
    dims = [
        (in_dim, hid_dim),             # linear_e1
        (hid_dim, hid_dim // 2),       # linear_e2
        (hid_dim // 2, hid_dim // 4),  # linear_e3
        (hid_dim // 4, hid_dim // 2),  # linear_d3
        (hid_dim // 2, hid_dim),       # linear_d4
        (hid_dim, in_dim),             # linear_d5
    ]
    params = []
    for (fan_in, fan_out) in dims:
        key, kw, kb = jax.random.split(key, 3)
        bound = 1.0 / jnp.sqrt(jnp.asarray(fan_in, dtype))
        w = jax.random.uniform(kw, (fan_in, fan_out), dtype, -bound, bound)
        b = jax.random.uniform(kb, (1, fan_out), dtype, -bound, bound)
        params.append((w, b))
    return params


def prepare_params(params):
    """Zero-pad every layer's feature dims to the lane multiple; weights cast
    to bf16 (MXU operands), biases stay f32 with shape (1, N_pad).

    Padding is exact: padded x/weight/bias entries are zero and SELU(0)=0, so
    the real columns of every activation equal the unpadded math."""
    max_dim = max(max(w.shape) for w, _ in params)
    # 256-aligned padding only pays off on the 256x256 MXUs (v6e/v7x) and only
    # once the real widths exceed 128; otherwise stick to 128 lanes.
    lane = 256 if (max_dim > 128 and not _is_pre_v6()) else 128
    padded = []
    for w, b in params:
        k, n = w.shape
        kp, np_ = _round_up(k, lane), _round_up(n, lane)
        wp = jnp.zeros((kp, np_), jnp.float32).at[:k, :n].set(w).astype(jnp.bfloat16)
        bp = jnp.zeros((1, np_), jnp.float32).at[:, :n].set(jnp.reshape(b, (1, n)))
        padded.append((wp, bp))
    return padded


@functools.partial(
    jax.jit, static_argnames=("in_dim", "code_dim", "single_buffer_weights"))
def _forward_impl(x, padded_params, *, in_dim, code_dim, single_buffer_weights):
    batch = x.shape[0]
    (we1, be1), (we2, be2), (we3, be3), (wd3, bd3), (wd4, bd4), (wd5, bd5) = padded_params
    in_pad, hid_pad = we1.shape
    hid2_pad = we2.shape[1]
    code_pad = we3.shape[1]

    # ---- batch tiling: minimal padding, big tiles, >=2 steps when possible --
    batch8 = _round_up(max(batch, 1), _SUBLANE)
    if batch8 >= 2 * _SUBLANE:
        tb = min(TB_MAX, _round_up(pl.cdiv(batch8, 2), _SUBLANE))
    else:
        tb = batch8
    batch_pad = _round_up(batch8, tb)
    grid = (batch_pad // tb,)

    # bf16 padded input built in one fused pad+cast (no full f32 HBM copy).
    x_pad = jnp.pad(x.astype(jnp.bfloat16),
                    ((0, batch_pad - batch), (0, in_pad - in_dim)))

    wkwargs = {}
    if single_buffer_weights:
        # constant-index operands never change block -> single buffer is enough
        wkwargs["pipeline_mode"] = pl.Buffered(1)

    def wspec(arr):
        # Weights / biases: full array, constant block index -> DMA'd once,
        # VMEM-resident across the whole batch grid.
        return pl.BlockSpec(arr.shape, lambda i: (0, 0), **wkwargs)

    weight_args = [we1, be1, we2, be2, we3, be3, wd3, bd3, wd4, bd4, wd5, bd5]
    in_specs = [pl.BlockSpec((tb, in_pad), lambda i: (i, 0))]
    in_specs += [wspec(a) for a in weight_args]

    out_specs = (
        pl.BlockSpec((tb, in_pad), lambda i: (i, 0)),     # x_hat tile
        pl.BlockSpec((tb, code_pad), lambda i: (i, 0)),   # code tile
    )
    out_shapes = (
        jax.ShapeDtypeStruct((batch_pad, in_pad), jnp.bfloat16),
        jax.ShapeDtypeStruct((batch_pad, code_pad), jnp.bfloat16),
    )

    # ---- cost estimate + explicit VMEM budget ----
    layer_dims = [(w.shape[0], w.shape[1]) for w, _ in padded_params]
    flops = 2 * batch_pad * sum(k * n for k, n in layer_dims)
    transcendentals = batch_pad * (2 * hid_pad + 2 * hid2_pad + 2 * in_pad)
    bytes_accessed = (
        2 * batch_pad * (2 * in_pad + code_pad)            # bf16 x in, outs out
        + sum(2 * k * n + 4 * n for k, n in layer_dims))   # bf16 W + f32 b

    weight_bytes = sum(int(a.size) * a.dtype.itemsize for a in weight_args)
    wbuf = 1 if single_buffer_weights else 2
    io_bytes = 2 * tb * (2 * in_pad * 2 + code_pad * 2)    # double-buffered bf16 tiles
    act_bytes = 6 * tb * max(n for _, n in layer_dims) * 4 # f32 intermediates
    vmem_limit = min(64 * 1024 * 1024,
                     max(16 * 1024 * 1024,
                         int(1.5 * (wbuf * weight_bytes + io_bytes + act_bytes))))

    xh_pad, c_pad = pl.pallas_call(
        _make_kernel(_elementwise_dtype()),
        grid=grid,
        in_specs=in_specs,
        out_specs=out_specs,
        out_shape=out_shapes,
        compiler_params=pltpu.CompilerParams(
            dimension_semantics=("parallel",),   # megacore sharding on v7x
            vmem_limit_bytes=vmem_limit,
        ),
        cost_estimate=pl.CostEstimate(
            flops=flops,
            transcendentals=transcendentals,
            bytes_accessed=bytes_accessed,
        ),
    )(x_pad, *weight_args)

    return xh_pad[:batch, :in_dim], c_pad[:batch, :code_dim]


_USE_SINGLE_BUFFERED_WEIGHTS = hasattr(pl, "Buffered")


def autoencoder_forward(x, padded_params, *, in_dim, code_dim):
    """Returns (reconstruction, code), matching AutoEncoder.forward (bf16 outs)."""
    global _USE_SINGLE_BUFFERED_WEIGHTS
    if _USE_SINGLE_BUFFERED_WEIGHTS:
        try:
            return _forward_impl(x, padded_params, in_dim=in_dim,
                                 code_dim=code_dim, single_buffer_weights=True)
        except Exception:
            # pl.Buffered(1) not accepted by this jax/Mosaic build; fall back
            # to default double-buffered weights (~200 KiB extra VMEM here).
            _USE_SINGLE_BUFFERED_WEIGHTS = False
    return _forward_impl(x, padded_params, in_dim=in_dim,
                         code_dim=code_dim, single_buffer_weights=False)


if __name__ == "__main__":
    batch, in_dim, hid_dim = 8, 64, 32
    code_dim = hid_dim // 4

    key = jax.random.PRNGKey(0)
    key, kx = jax.random.split(key)
    x = jax.random.normal(kx, (batch, in_dim), jnp.float32)

    params = init_params(key, in_dim, hid_dim)      # f32, unpadded (reference)
    padded_params = prepare_params(params)          # lane-padded, bf16 weights

    x_hat, code = autoencoder_forward(x, padded_params,
                                      in_dim=in_dim, code_dim=code_dim)
    jax.block_until_ready((x_hat, code))

    # Pure-JAX f32 reference (tolerances cover bf16 matmul operands, bf16
    # elementwise on v6e/v7x, bf16 outputs and the approx-reciprocal sigmoid).
    def ref(x, params):
        (we1, be1), (we2, be2), (we3, be3), (wd3, bd3), (wd4, bd4), (wd5, bd5) = params
        h = _selu_ref(x @ we1 + be1)
        h = _selu_ref(h @ we2 + be2)
        c = h @ we3 + be3
        d = _selu_ref(c @ wd3 + bd3)
        d = _selu_ref(d @ wd4 + bd4)
        d = d @ wd5 + bd5
        return jax.nn.sigmoid(d), c

    r_x, r_c = ref(x, params)
    assert x_hat.shape == (batch, in_dim) and code.shape == (batch, code_dim)
    assert jnp.allclose(x_hat.astype(jnp.float32), r_x, atol=5e-2, rtol=5e-2)
    assert jnp.allclose(code.astype(jnp.float32), r_c, atol=5e-2, rtol=5e-2)

    print("KERNEL_OK")
</pallas_src>

<mosaic_0001>
module attributes {stable_mosaic.version = 11 : i64} {
  func.func @kernel(%arg0: i32, %arg1: memref<8x128xbf16, #tpu.memory_space<vmem>>, %arg2: memref<128x128xbf16, #tpu.memory_space<vmem>>, %arg3: memref<1x128xf32, #tpu.memory_space<vmem>>, %arg4: memref<128x128xbf16, #tpu.memory_space<vmem>>, %arg5: memref<1x128xf32, #tpu.memory_space<vmem>>, %arg6: memref<128x128xbf16, #tpu.memory_space<vmem>>, %arg7: memref<1x128xf32, #tpu.memory_space<vmem>>, %arg8: memref<128x128xbf16, #tpu.memory_space<vmem>>, %arg9: memref<1x128xf32, #tpu.memory_space<vmem>>, %arg10: memref<128x128xbf16, #tpu.memory_space<vmem>>, %arg11: memref<1x128xf32, #tpu.memory_space<vmem>>, %arg12: memref<128x128xbf16, #tpu.memory_space<vmem>>, %arg13: memref<1x128xf32, #tpu.memory_space<vmem>>, %arg14: memref<8x128xbf16, #tpu.memory_space<vmem>>, %arg15: memref<8x128xbf16, #tpu.memory_space<vmem>>) attributes {dimension_semantics = [#tpu.dimension_semantics<parallel>], iteration_bounds = array<i64: 1>, scalar_prefetch = 0 : i64, scratch_operands = 0 : i64, tpu.core_type = #tpu.core_type<tc>, window_params = [{transform_indices = @transform_0, window_bounds = array<i64: 8, 128>}, {pipeline_mode = #tpu.pipeline_mode<synchronous>, transform_indices = @transform_1, window_bounds = array<i64: 128, 128>}, {pipeline_mode = #tpu.pipeline_mode<synchronous>, transform_indices = @transform_2, window_bounds = array<i64: 1, 128>}, {pipeline_mode = #tpu.pipeline_mode<synchronous>, transform_indices = @transform_3, window_bounds = array<i64: 128, 128>}, {pipeline_mode = #tpu.pipeline_mode<synchronous>, transform_indices = @transform_4, window_bounds = array<i64: 1, 128>}, {pipeline_mode = #tpu.pipeline_mode<synchronous>, transform_indices = @transform_5, window_bounds = array<i64: 128, 128>}, {pipeline_mode = #tpu.pipeline_mode<synchronous>, transform_indices = @transform_6, window_bounds = array<i64: 1, 128>}, {pipeline_mode = #tpu.pipeline_mode<synchronous>, transform_indices = @transform_7, window_bounds = array<i64: 128, 128>}, {pipeline_mode = #tpu.pipeline_mode<synchronous>, transform_indices = @transform_8, window_bounds = array<i64: 1, 128>}, {pipeline_mode = #tpu.pipeline_mode<synchronous>, transform_indices = @transform_9, window_bounds = array<i64: 128, 128>}, {pipeline_mode = #tpu.pipeline_mode<synchronous>, transform_indices = @transform_10, window_bounds = array<i64: 1, 128>}, {pipeline_mode = #tpu.pipeline_mode<synchronous>, transform_indices = @transform_11, window_bounds = array<i64: 128, 128>}, {pipeline_mode = #tpu.pipeline_mode<synchronous>, transform_indices = @transform_12, window_bounds = array<i64: 1, 128>}, {transform_indices = @transform_13, window_bounds = array<i64: 8, 128>}, {transform_indices = @transform_14, window_bounds = array<i64: 8, 128>}]} {
    %c0 = arith.constant 0 : index
    %c0_0 = arith.constant 0 : index
    %0 = vector.load %arg1[%c0, %c0_0] : memref<8x128xbf16, #tpu.memory_space<vmem>>, vector<8x128xbf16>
    %c0_1 = arith.constant 0 : index
    %c0_2 = arith.constant 0 : index
    %1 = vector.load %arg2[%c0_1, %c0_2] : memref<128x128xbf16, #tpu.memory_space<vmem>>, vector<128x128xbf16>
    %cst = arith.constant dense<0.000000e+00> : vector<8x128xf32>
    %2 = tpu.matmul %0, %1, %cst {dimension_numbers = #tpu.dot_dimension_numbers<[1], [0], [0], [1], [0, 0, 1, 1], [], []>} : vector<8x128xbf16>, vector<128x128xbf16>, vector<8x128xf32> -> vector<8x128xf32>
    %c0_3 = arith.constant 0 : index
    %c0_4 = arith.constant 0 : index
    %3 = vector.load %arg3[%c0_3, %c0_4] : memref<1x128xf32, #tpu.memory_space<vmem>>, vector<1x128xf32>
    %4 = vector.broadcast %3 : vector<1x128xf32> to vector<8x128xf32>
    %5 = arith.addf %2, %4 : vector<8x128xf32>
    %6 = arith.truncf %5 : vector<8x128xf32> to vector<8x128xbf16>
    %cst_5 = arith.constant 0.000000e+00 : bf16
    %7 = vector.broadcast %cst_5 : bf16 to vector<8x128xbf16>
    %8 = arith.cmpf ogt, %6, %7 : vector<8x128xbf16>
    %9 = math.exp %6 : vector<8x128xbf16>
    %cst_6 = arith.constant 1.000000e+00 : bf16
    %10 = vector.broadcast %cst_6 : bf16 to vector<8x128xbf16>
    %11 = arith.subf %9, %10 : vector<8x128xbf16>
    %cst_7 = arith.constant 1.671880e+00 : bf16
    %12 = vector.broadcast %cst_7 : bf16 to vector<8x128xbf16>
    %13 = arith.mulf %12, %11 : vector<8x128xbf16>
    %14 = arith.select %8, %6, %13 : vector<8x128xi1>, vector<8x128xbf16>
    %cst_8 = arith.constant 1.046880e+00 : bf16
    %15 = vector.broadcast %cst_8 : bf16 to vector<8x128xbf16>
    %16 = arith.mulf %15, %14 : vector<8x128xbf16>
    %c0_9 = arith.constant 0 : index
    %c0_10 = arith.constant 0 : index
    %17 = vector.load %arg4[%c0_9, %c0_10] : memref<128x128xbf16, #tpu.memory_space<vmem>>, vector<128x128xbf16>
    %cst_11 = arith.constant dense<0.000000e+00> : vector<8x128xf32>
    %18 = tpu.matmul %16, %17, %cst_11 {dimension_numbers = #tpu.dot_dimension_numbers<[1], [0], [0], [1], [0, 0, 1, 1], [], []>} : vector<8x128xbf16>, vector<128x128xbf16>, vector<8x128xf32> -> vector<8x128xf32>
    %c0_12 = arith.constant 0 : index
    %c0_13 = arith.constant 0 : index
    %19 = vector.load %arg5[%c0_12, %c0_13] : memref<1x128xf32, #tpu.memory_space<vmem>>, vector<1x128xf32>
    %20 = vector.broadcast %19 : vector<1x128xf32> to vector<8x128xf32>
    %21 = arith.addf %18, %20 : vector<8x128xf32>
    %22 = arith.truncf %21 : vector<8x128xf32> to vector<8x128xbf16>
    %cst_14 = arith.constant 0.000000e+00 : bf16
    %23 = vector.broadcast %cst_14 : bf16 to vector<8x128xbf16>
    %24 = arith.cmpf ogt, %22, %23 : vector<8x128xbf16>
    %25 = math.exp %22 : vector<8x128xbf16>
    %cst_15 = arith.constant 1.000000e+00 : bf16
    %26 = vector.broadcast %cst_15 : bf16 to vector<8x128xbf16>
    %27 = arith.subf %25, %26 : vector<8x128xbf16>
    %cst_16 = arith.constant 1.671880e+00 : bf16
    %28 = vector.broadcast %cst_16 : bf16 to vector<8x128xbf16>
    %29 = arith.mulf %28, %27 : vector<8x128xbf16>
    %30 = arith.select %24, %22, %29 : vector<8x128xi1>, vector<8x128xbf16>
    %cst_17 = arith.constant 1.046880e+00 : bf16
    %31 = vector.broadcast %cst_17 : bf16 to vector<8x128xbf16>
    %32 = arith.mulf %31, %30 : vector<8x128xbf16>
    %c0_18 = arith.constant 0 : index
    %c0_19 = arith.constant 0 : index
    %33 = vector.load %arg6[%c0_18, %c0_19] : memref<128x128xbf16, #tpu.memory_space<vmem>>, vector<128x128xbf16>
    %cst_20 = arith.constant dense<0.000000e+00> : vector<8x128xf32>
    %34 = tpu.matmul %32, %33, %cst_20 {dimension_numbers = #tpu.dot_dimension_numbers<[1], [0], [0], [1], [0, 0, 1, 1], [], []>} : vector<8x128xbf16>, vector<128x128xbf16>, vector<8x128xf32> -> vector<8x128xf32>
    %c0_21 = arith.constant 0 : index
    %c0_22 = arith.constant 0 : index
    %35 = vector.load %arg7[%c0_21, %c0_22] : memref<1x128xf32, #tpu.memory_space<vmem>>, vector<1x128xf32>
    %36 = vector.broadcast %35 : vector<1x128xf32> to vector<8x128xf32>
    %37 = arith.addf %34, %36 : vector<8x128xf32>
    %38 = arith.truncf %37 : vector<8x128xf32> to vector<8x128xbf16>
    %c0_23 = arith.constant 0 : index
    %c0_24 = arith.constant 0 : index
    %39 = vector.load %arg15[%c0_23, %c0_24] : memref<8x128xbf16, #tpu.memory_space<vmem>>, vector<8x128xbf16>
    tpu.vector_store %arg15[%c0_23, %c0_24], %38 {strides = array<i32>} : memref<8x128xbf16, #tpu.memory_space<vmem>>, vector<8x128xbf16>,
    %40 = arith.truncf %37 : vector<8x128xf32> to vector<8x128xbf16>
    %c0_25 = arith.constant 0 : index
    %c0_26 = arith.constant 0 : index
    %41 = vector.load %arg8[%c0_25, %c0_26] : memref<128x128xbf16, #tpu.memory_space<vmem>>, vector<128x128xbf16>
    %cst_27 = arith.constant dense<0.000000e+00> : vector<8x128xf32>
    %42 = tpu.matmul %40, %41, %cst_27 {dimension_numbers = #tpu.dot_dimension_numbers<[1], [0], [0], [1], [0, 0, 1, 1], [], []>} : vector<8x128xbf16>, vector<128x128xbf16>, vector<8x128xf32> -> vector<8x128xf32>
    %c0_28 = arith.constant 0 : index
    %c0_29 = arith.constant 0 : index
    %43 = vector.load %arg9[%c0_28, %c0_29] : memref<1x128xf32, #tpu.memory_space<vmem>>, vector<1x128xf32>
    %44 = vector.broadcast %43 : vector<1x128xf32> to vector<8x128xf32>
    %45 = arith.addf %42, %44 : vector<8x128xf32>
    %46 = arith.truncf %45 : vector<8x128xf32> to vector<8x128xbf16>
    %cst_30 = arith.constant 0.000000e+00 : bf16
    %47 = vector.broadcast %cst_30 : bf16 to vector<8x128xbf16>
    %48 = arith.cmpf ogt, %46, %47 : vector<8x128xbf16>
    %49 = math.exp %46 : vector<8x128xbf16>
    %cst_31 = arith.constant 1.000000e+00 : bf16
    %50 = vector.broadcast %cst_31 : bf16 to vector<8x128xbf16>
    %51 = arith.subf %49, %50 : vector<8x128xbf16>
    %cst_32 = arith.constant 1.671880e+00 : bf16
    %52 = vector.broadcast %cst_32 : bf16 to vector<8x128xbf16>
    %53 = arith.mulf %52, %51 : vector<8x128xbf16>
    %54 = arith.select %48, %46, %53 : vector<8x128xi1>, vector<8x128xbf16>
    %cst_33 = arith.constant 1.046880e+00 : bf16
    %55 = vector.broadcast %cst_33 : bf16 to vector<8x128xbf16>
    %56 = arith.mulf %55, %54 : vector<8x128xbf16>
    %c0_34 = arith.constant 0 : index
    %c0_35 = arith.constant 0 : index
    %57 = vector.load %arg10[%c0_34, %c0_35] : memref<128x128xbf16, #tpu.memory_space<vmem>>, vector<128x128xbf16>
    %cst_36 = arith.constant dense<0.000000e+00> : vector<8x128xf32>
    %58 = tpu.matmul %56, %57, %cst_36 {dimension_numbers = #tpu.dot_dimension_numbers<[1], [0], [0], [1], [0, 0, 1, 1], [], []>} : vector<8x128xbf16>, vector<128x128xbf16>, vector<8x128xf32> -> vector<8x128xf32>
    %c0_37 = arith.constant 0 : index
    %c0_38 = arith.constant 0 : index
    %59 = vector.load %arg11[%c0_37, %c0_38] : memref<1x128xf32, #tpu.memory_space<vmem>>, vector<1x128xf32>
    %60 = vector.broadcast %59 : vector<1x128xf32> to vector<8x128xf32>
    %61 = arith.addf %58, %60 : vector<8x128xf32>
    %62 = arith.truncf %61 : vector<8x128xf32> to vector<8x128xbf16>
    %cst_39 = arith.constant 0.000000e+00 : bf16
    %63 = vector.broadcast %cst_39 : bf16 to vector<8x128xbf16>
    %64 = arith.cmpf ogt, %62, %63 : vector<8x128xbf16>
    %65 = math.exp %62 : vector<8x128xbf16>
    %cst_40 = arith.constant 1.000000e+00 : bf16
    %66 = vector.broadcast %cst_40 : bf16 to vector<8x128xbf16>
    %67 = arith.subf %65, %66 : vector<8x128xbf16>
    %cst_41 = arith.constant 1.671880e+00 : bf16
    %68 = vector.broadcast %cst_41 : bf16 to vector<8x128xbf16>
    %69 = arith.mulf %68, %67 : vector<8x128xbf16>
    %70 = arith.select %64, %62, %69 : vector<8x128xi1>, vector<8x128xbf16>
    %cst_42 = arith.constant 1.046880e+00 : bf16
    %71 = vector.broadcast %cst_42 : bf16 to vector<8x128xbf16>
    %72 = arith.mulf %71, %70 : vector<8x128xbf16>
    %c0_43 = arith.constant 0 : index
    %c0_44 = arith.constant 0 : index
    %73 = vector.load %arg12[%c0_43, %c0_44] : memref<128x128xbf16, #tpu.memory_space<vmem>>, vector<128x128xbf16>
    %cst_45 = arith.constant dense<0.000000e+00> : vector<8x128xf32>
    %74 = tpu.matmul %72, %73, %cst_45 {dimension_numbers = #tpu.dot_dimension_numbers<[1], [0], [0], [1], [0, 0, 1, 1], [], []>} : vector<8x128xbf16>, vector<128x128xbf16>, vector<8x128xf32> -> vector<8x128xf32>
    %c0_46 = arith.constant 0 : index
    %c0_47 = arith.constant 0 : index
    %75 = vector.load %arg13[%c0_46, %c0_47] : memref<1x128xf32, #tpu.memory_space<vmem>>, vector<1x128xf32>
    %76 = vector.broadcast %75 : vector<1x128xf32> to vector<8x128xf32>
    %77 = arith.addf %74, %76 : vector<8x128xf32>
    %cst_48 = arith.constant 0.000000e+00 : f32
    %78 = vector.broadcast %cst_48 : f32 to vector<8x128xf32>
    %79 = arith.subf %78, %77 : vector<8x128xf32>
    %80 = math.exp %79 : vector<8x128xf32>
    %cst_49 = arith.constant 1.000000e+00 : f32
    %81 = vector.broadcast %cst_49 : f32 to vector<8x128xf32>
    %82 = arith.addf %81, %80 : vector<8x128xf32>
    %83 = tpu.reciprocal %82 {approx = true} : vector<8x128xf32> -> vector<8x128xf32>
    %84 = arith.truncf %83 : vector<8x128xf32> to vector<8x128xbf16>
    %c0_50 = arith.constant 0 : index
    %c0_51 = arith.constant 0 : index
    %85 = vector.load %arg14[%c0_50, %c0_51] : memref<8x128xbf16, #tpu.memory_space<vmem>>, vector<8x128xbf16>
    tpu.vector_store %arg14[%c0_50, %c0_51], %84 {strides = array<i32>} : memref<8x128xbf16, #tpu.memory_space<vmem>>, vector<8x128xbf16>,
    return
  }
  func.func @transform_0(%arg0: i32) -> (i32, i32) {
    %c0_i32 = arith.constant 0 : i32
    %c0_i32_0 = arith.constant 0 : i32
    return %arg0, %c0_i32 : i32, i32
  }
  func.func @transform_1(%arg0: i32) -> (i32, i32) {
    %c0_i32 = arith.constant 0 : i32
    %c0_i32_0 = arith.constant 0 : i32
    %c0_i32_1 = arith.constant 0 : i32
    return %c0_i32, %c0_i32_0 : i32, i32
  }
  func.func @transform_2(%arg0: i32) -> (i32, i32) {
    %c0_i32 = arith.constant 0 : i32
    %c0_i32_0 = arith.constant 0 : i32
    %c0_i32_1 = arith.constant 0 : i32
    return %c0_i32, %c0_i32_0 : i32, i32
  }
  func.func @transform_3(%arg0: i32) -> (i32, i32) {
    %c0_i32 = arith.constant 0 : i32
    %c0_i32_0 = arith.constant 0 : i32
    %c0_i32_1 = arith.constant 0 : i32
    return %c0_i32, %c0_i32_0 : i32, i32
  }
  func.func @transform_4(%arg0: i32) -> (i32, i32) {
    %c0_i32 = arith.constant 0 : i32
    %c0_i32_0 = arith.constant 0 : i32
    %c0_i32_1 = arith.constant 0 : i32
    return %c0_i32, %c0_i32_0 : i32, i32
  }
  func.func @transform_5(%arg0: i32) -> (i32, i32) {
    %c0_i32 = arith.constant 0 : i32
    %c0_i32_0 = arith.constant 0 : i32
    %c0_i32_1 = arith.constant 0 : i32
    return %c0_i32, %c0_i32_0 : i32, i32
  }
  func.func @transform_6(%arg0: i32) -> (i32, i32) {
    %c0_i32 = arith.constant 0 : i32
    %c0_i32_0 = arith.constant 0 : i32
    %c0_i32_1 = arith.constant 0 : i32
    return %c0_i32, %c0_i32_0 : i32, i32
  }
  func.func @transform_7(%arg0: i32) -> (i32, i32) {
    %c0_i32 = arith.constant 0 : i32
    %c0_i32_0 = arith.constant 0 : i32
    %c0_i32_1 = arith.constant 0 : i32
    return %c0_i32, %c0_i32_0 : i32, i32
  }
  func.func @transform_8(%arg0: i32) -> (i32, i32) {
    %c0_i32 = arith.constant 0 : i32
    %c0_i32_0 = arith.constant 0 : i32
    %c0_i32_1 = arith.constant 0 : i32
    return %c0_i32, %c0_i32_0 : i32, i32
  }
  func.func @transform_9(%arg0: i32) -> (i32, i32) {
    %c0_i32 = arith.constant 0 : i32
    %c0_i32_0 = arith.constant 0 : i32
    %c0_i32_1 = arith.constant 0 : i32
    return %c0_i32, %c0_i32_0 : i32, i32
  }
  func.func @transform_10(%arg0: i32) -> (i32, i32) {
    %c0_i32 = arith.constant 0 : i32
    %c0_i32_0 = arith.constant 0 : i32
    %c0_i32_1 = arith.constant 0 : i32
    return %c0_i32, %c0_i32_0 : i32, i32
  }
  func.func @transform_11(%arg0: i32) -> (i32, i32) {
    %c0_i32 = arith.constant 0 : i32
    %c0_i32_0 = arith.constant 0 : i32
    %c0_i32_1 = arith.constant 0 : i32
    return %c0_i32, %c0_i32_0 : i32, i32
  }
  func.func @transform_12(%arg0: i32) -> (i32, i32) {
    %c0_i32 = arith.constant 0 : i32
    %c0_i32_0 = arith.constant 0 : i32
    %c0_i32_1 = arith.constant 0 : i32
    return %c0_i32, %c0_i32_0 : i32, i32
  }
  func.func @transform_13(%arg0: i32) -> (i32, i32) {
    %c0_i32 = arith.constant 0 : i32
    %c0_i32_0 = arith.constant 0 : i32
    return %arg0, %c0_i32 : i32, i32
  }
  func.func @transform_14(%arg0: i32) -> (i32, i32) {
    %c0_i32 = arith.constant 0 : i32
    %c0_i32_0 = arith.constant 0 : i32
    return %arg0, %c0_i32 : i32, i32
  }
}

module attributes {stable_mosaic.version = 11 : i64} {
  func.func @kernel(%arg0: i32, %arg1: memref<8x128xbf16, #tpu.memory_space<vmem>>, %arg2: memref<128x128xbf16, #tpu.memory_space<vmem>>, %arg3: memref<1x128xf32, #tpu.memory_space<vmem>>, %arg4: memref<128x128xbf16, #tpu.memory_space<vmem>>, %arg5: memref<1x128xf32, #tpu.memory_space<vmem>>, %arg6: memref<128x128xbf16, #tpu.memory_space<vmem>>, %arg7: memref<1x128xf32, #tpu.memory_space<vmem>>, %arg8: memref<128x128xbf16, #tpu.memory_space<vmem>>, %arg9: memref<1x128xf32, #tpu.memory_space<vmem>>, %arg10: memref<128x128xbf16, #tpu.memory_space<vmem>>, %arg11: memref<1x128xf32, #tpu.memory_space<vmem>>, %arg12: memref<128x128xbf16, #tpu.memory_space<vmem>>, %arg13: memref<1x128xf32, #tpu.memory_space<vmem>>, %arg14: memref<8x128xbf16, #tpu.memory_space<vmem>>, %arg15: memref<8x128xbf16, #tpu.memory_space<vmem>>) attributes {dimension_semantics = [#tpu.dimension_semantics<parallel>], iteration_bounds = array<i64: 1>, scalar_prefetch = 0 : i64, scratch_operands = 0 : i64, tpu.core_type = #tpu.core_type<tc>, window_params = [{transform_indices = @transform_0, window_bounds = array<i64: 8, 128>}, {pipeline_mode = #tpu.pipeline_mode<synchronous>, transform_indices = @transform_1, window_bounds = array<i64: 128, 128>}, {pipeline_mode = #tpu.pipeline_mode<synchronous>, transform_indices = @transform_2, window_bounds = array<i64: 1, 128>}, {pipeline_mode = #tpu.pipeline_mode<synchronous>, transform_indices = @transform_3, window_bounds = array<i64: 128, 128>}, {pipeline_mode = #tpu.pipeline_mode<synchronous>, transform_indices = @transform_4, window_bounds = array<i64: 1, 128>}, {pipeline_mode = #tpu.pipeline_mode<synchronous>, transform_indices = @transform_5, window_bounds = array<i64: 128, 128>}, {pipeline_mode = #tpu.pipeline_mode<synchronous>, transform_indices = @transform_6, window_bounds = array<i64: 1, 128>}, {pipeline_mode = #tpu.pipeline_mode<synchronous>, transform_indices = @transform_7, window_bounds = array<i64: 128, 128>}, {pipeline_mode = #tpu.pipeline_mode<synchronous>, transform_indices = @transform_8, window_bounds = array<i64: 1, 128>}, {pipeline_mode = #tpu.pipeline_mode<synchronous>, transform_indices = @transform_9, window_bounds = array<i64: 128, 128>}, {pipeline_mode = #tpu.pipeline_mode<synchronous>, transform_indices = @transform_10, window_bounds = array<i64: 1, 128>}, {pipeline_mode = #tpu.pipeline_mode<synchronous>, transform_indices = @transform_11, window_bounds = array<i64: 128, 128>}, {pipeline_mode = #tpu.pipeline_mode<synchronous>, transform_indices = @transform_12, window_bounds = array<i64: 1, 128>}, {transform_indices = @transform_13, window_bounds = array<i64: 8, 128>}, {transform_indices = @transform_14, window_bounds = array<i64: 8, 128>}]} {
    %c0 = arith.constant 0 : index
    %c0_0 = arith.constant 0 : index
    %0 = vector.load %arg1[%c0, %c0_0] : memref<8x128xbf16, #tpu.memory_space<vmem>>, vector<8x128xbf16>
    %c0_1 = arith.constant 0 : index
    %c0_2 = arith.constant 0 : index
    %1 = vector.load %arg2[%c0_1, %c0_2] : memref<128x128xbf16, #tpu.memory_space<vmem>>, vector<128x128xbf16>
    %cst = arith.constant dense<0.000000e+00> : vector<8x128xf32>
    %2 = tpu.matmul %0, %1, %cst {dimension_numbers = #tpu.dot_dimension_numbers<[1], [0], [0], [1], [0, 0, 1, 1], [], []>} : vector<8x128xbf16>, vector<128x128xbf16>, vector<8x128xf32> -> vector<8x128xf32>
    %c0_3 = arith.constant 0 : index
    %c0_4 = arith.constant 0 : index
    %3 = vector.load %arg3[%c0_3, %c0_4] : memref<1x128xf32, #tpu.memory_space<vmem>>, vector<1x128xf32>
    %4 = vector.broadcast %3 : vector<1x128xf32> to vector<8x128xf32>
    %5 = arith.addf %2, %4 : vector<8x128xf32>
    %6 = arith.truncf %5 : vector<8x128xf32> to vector<8x128xbf16>
    %cst_5 = arith.constant 0.000000e+00 : bf16
    %7 = vector.broadcast %cst_5 : bf16 to vector<8x128xbf16>
    %8 = arith.cmpf ogt, %6, %7 : vector<8x128xbf16>
    %9 = math.exp %6 : vector<8x128xbf16>
    %cst_6 = arith.constant 1.000000e+00 : bf16
    %10 = vector.broadcast %cst_6 : bf16 to vector<8x128xbf16>
    %11 = arith.subf %9, %10 : vector<8x128xbf16>
    %cst_7 = arith.constant 1.671880e+00 : bf16
    %12 = vector.broadcast %cst_7 : bf16 to vector<8x128xbf16>
    %13 = arith.mulf %12, %11 : vector<8x128xbf16>
    %14 = arith.select %8, %6, %13 : vector<8x128xi1>, vector<8x128xbf16>
    %cst_8 = arith.constant 1.046880e+00 : bf16
    %15 = vector.broadcast %cst_8 : bf16 to vector<8x128xbf16>
    %16 = arith.mulf %15, %14 : vector<8x128xbf16>
    %c0_9 = arith.constant 0 : index
    %c0_10 = arith.constant 0 : index
    %17 = vector.load %arg4[%c0_9, %c0_10] : memref<128x128xbf16, #tpu.memory_space<vmem>>, vector<128x128xbf16>
    %cst_11 = arith.constant dense<0.000000e+00> : vector<8x128xf32>
    %18 = tpu.matmul %16, %17, %cst_11 {dimension_numbers = #tpu.dot_dimension_numbers<[1], [0], [0], [1], [0, 0, 1, 1], [], []>} : vector<8x128xbf16>, vector<128x128xbf16>, vector<8x128xf32> -> vector<8x128xf32>
    %c0_12 = arith.constant 0 : index
    %c0_13 = arith.constant 0 : index
    %19 = vector.load %arg5[%c0_12, %c0_13] : memref<1x128xf32, #tpu.memory_space<vmem>>, vector<1x128xf32>
    %20 = vector.broadcast %19 : vector<1x128xf32> to vector<8x128xf32>
    %21 = arith.addf %18, %20 : vector<8x128xf32>
    %22 = arith.truncf %21 : vector<8x128xf32> to vector<8x128xbf16>
    %cst_14 = arith.constant 0.000000e+00 : bf16
    %23 = vector.broadcast %cst_14 : bf16 to vector<8x128xbf16>
    %24 = arith.cmpf ogt, %22, %23 : vector<8x128xbf16>
    %25 = math.exp %22 : vector<8x128xbf16>
    %cst_15 = arith.constant 1.000000e+00 : bf16
    %26 = vector.broadcast %cst_15 : bf16 to vector<8x128xbf16>
    %27 = arith.subf %25, %26 : vector<8x128xbf16>
    %cst_16 = arith.constant 1.671880e+00 : bf16
    %28 = vector.broadcast %cst_16 : bf16 to vector<8x128xbf16>
    %29 = arith.mulf %28, %27 : vector<8x128xbf16>
    %30 = arith.select %24, %22, %29 : vector<8x128xi1>, vector<8x128xbf16>
    %cst_17 = arith.constant 1.046880e+00 : bf16
    %31 = vector.broadcast %cst_17 : bf16 to vector<8x128xbf16>
    %32 = arith.mulf %31, %30 : vector<8x128xbf16>
    %c0_18 = arith.constant 0 : index
    %c0_19 = arith.constant 0 : index
    %33 = vector.load %arg6[%c0_18, %c0_19] : memref<128x128xbf16, #tpu.memory_space<vmem>>, vector<128x128xbf16>
    %cst_20 = arith.constant dense<0.000000e+00> : vector<8x128xf32>
    %34 = tpu.matmul %32, %33, %cst_20 {dimension_numbers = #tpu.dot_dimension_numbers<[1], [0], [0], [1], [0, 0, 1, 1], [], []>} : vector<8x128xbf16>, vector<128x128xbf16>, vector<8x128xf32> -> vector<8x128xf32>
    %c0_21 = arith.constant 0 : index
    %c0_22 = arith.constant 0 : index
    %35 = vector.load %arg7[%c0_21, %c0_22] : memref<1x128xf32, #tpu.memory_space<vmem>>, vector<1x128xf32>
    %36 = vector.broadcast %35 : vector<1x128xf32> to vector<8x128xf32>
    %37 = arith.addf %34, %36 : vector<8x128xf32>
    %38 = arith.truncf %37 : vector<8x128xf32> to vector<8x128xbf16>
    %c0_23 = arith.constant 0 : index
    %c0_24 = arith.constant 0 : index
    %39 = vector.load %arg15[%c0_23, %c0_24] : memref<8x128xbf16, #tpu.memory_space<vmem>>, vector<8x128xbf16>
    tpu.vector_store %arg15[%c0_23, %c0_24], %38 {strides = array<i32>} : memref<8x128xbf16, #tpu.memory_space<vmem>>, vector<8x128xbf16>,
    %40 = arith.truncf %37 : vector<8x128xf32> to vector<8x128xbf16>
    %c0_25 = arith.constant 0 : index
    %c0_26 = arith.constant 0 : index
    %41 = vector.load %arg8[%c0_25, %c0_26] : memref<128x128xbf16, #tpu.memory_space<vmem>>, vector<128x128xbf16>
    %cst_27 = arith.constant dense<0.000000e+00> : vector<8x128xf32>
    %42 = tpu.matmul %40, %41, %cst_27 {dimension_numbers = #tpu.dot_dimension_numbers<[1], [0], [0], [1], [0, 0, 1, 1], [], []>} : vector<8x128xbf16>, vector<128x128xbf16>, vector<8x128xf32> -> vector<8x128xf32>
    %c0_28 = arith.constant 0 : index
    %c0_29 = arith.constant 0 : index
    %43 = vector.load %arg9[%c0_28, %c0_29] : memref<1x128xf32, #tpu.memory_space<vmem>>, vector<1x128xf32>
    %44 = vector.broadcast %43 : vector<1x128xf32> to vector<8x128xf32>
    %45 = arith.addf %42, %44 : vector<8x128xf32>
    %46 = arith.truncf %45 : vector<8x128xf32> to vector<8x128xbf16>
    %cst_30 = arith.constant 0.000000e+00 : bf16
    %47 = vector.broadcast %cst_30 : bf16 to vector<8x128xbf16>
    %48 = arith.cmpf ogt, %46, %47 : vector<8x128xbf16>
    %49 = math.exp %46 : vector<8x128xbf16>
    %cst_31 = arith.constant 1.000000e+00 : bf16
    %50 = vector.broadcast %cst_31 : bf16 to vector<8x128xbf16>
    %51 = arith.subf %49, %50 : vector<8x128xbf16>
    %cst_32 = arith.constant 1.671880e+00 : bf16
    %52 = vector.broadcast %cst_32 : bf16 to vector<8x128xbf16>
    %53 = arith.mulf %52, %51 : vector<8x128xbf16>
    %54 = arith.select %48, %46, %53 : vector<8x128xi1>, vector<8x128xbf16>
    %cst_33 = arith.constant 1.046880e+00 : bf16
    %55 = vector.broadcast %cst_33 : bf16 to vector<8x128xbf16>
    %56 = arith.mulf %55, %54 : vector<8x128xbf16>
    %c0_34 = arith.constant 0 : index
    %c0_35 = arith.constant 0 : index
    %57 = vector.load %arg10[%c0_34, %c0_35] : memref<128x128xbf16, #tpu.memory_space<vmem>>, vector<128x128xbf16>
    %cst_36 = arith.constant dense<0.000000e+00> : vector<8x128xf32>
    %58 = tpu.matmul %56, %57, %cst_36 {dimension_numbers = #tpu.dot_dimension_numbers<[1], [0], [0], [1], [0, 0, 1, 1], [], []>} : vector<8x128xbf16>, vector<128x128xbf16>, vector<8x128xf32> -> vector<8x128xf32>
    %c0_37 = arith.constant 0 : index
    %c0_38 = arith.constant 0 : index
    %59 = vector.load %arg11[%c0_37, %c0_38] : memref<1x128xf32, #tpu.memory_space<vmem>>, vector<1x128xf32>
    %60 = vector.broadcast %59 : vector<1x128xf32> to vector<8x128xf32>
    %61 = arith.addf %58, %60 : vector<8x128xf32>
    %62 = arith.truncf %61 : vector<8x128xf32> to vector<8x128xbf16>
    %cst_39 = arith.constant 0.000000e+00 : bf16
    %63 = vector.broadcast %cst_39 : bf16 to vector<8x128xbf16>
    %64 = arith.cmpf ogt, %62, %63 : vector<8x128xbf16>
    %65 = math.exp %62 : vector<8x128xbf16>
    %cst_40 = arith.constant 1.000000e+00 : bf16
    %66 = vector.broadcast %cst_40 : bf16 to vector<8x128xbf16>
    %67 = arith.subf %65, %66 : vector<8x128xbf16>
    %cst_41 = arith.constant 1.671880e+00 : bf16
    %68 = vector.broadcast %cst_41 : bf16 to vector<8x128xbf16>
    %69 = arith.mulf %68, %67 : vector<8x128xbf16>
    %70 = arith.select %64, %62, %69 : vector<8x128xi1>, vector<8x128xbf16>
    %cst_42 = arith.constant 1.046880e+00 : bf16
    %71 = vector.broadcast %cst_42 : bf16 to vector<8x128xbf16>
    %72 = arith.mulf %71, %70 : vector<8x128xbf16>
    %c0_43 = arith.constant 0 : index
    %c0_44 = arith.constant 0 : index
    %73 = vector.load %arg12[%c0_43, %c0_44] : memref<128x128xbf16, #tpu.memory_space<vmem>>, vector<128x128xbf16>
    %cst_45 = arith.constant dense<0.000000e+00> : vector<8x128xf32>
    %74 = tpu.matmul %72, %73, %cst_45 {dimension_numbers = #tpu.dot_dimension_numbers<[1], [0], [0], [1], [0, 0, 1, 1], [], []>} : vector<8x128xbf16>, vector<128x128xbf16>, vector<8x128xf32> -> vector<8x128xf32>
    %c0_46 = arith.constant 0 : index
    %c0_47 = arith.constant 0 : index
    %75 = vector.load %arg13[%c0_46, %c0_47] : memref<1x128xf32, #tpu.memory_space<vmem>>, vector<1x128xf32>
    %76 = vector.broadcast %75 : vector<1x128xf32> to vector<8x128xf32>
    %77 = arith.addf %74, %76 : vector<8x128xf32>
    %cst_48 = arith.constant 0.000000e+00 : f32
    %78 = vector.broadcast %cst_48 : f32 to vector<8x128xf32>
    %79 = arith.subf %78, %77 : vector<8x128xf32>
    %80 = math.exp %79 : vector<8x128xf32>
    %cst_49 = arith.constant 1.000000e+00 : f32
    %81 = vector.broadcast %cst_49 : f32 to vector<8x128xf32>
    %82 = arith.addf %81, %80 : vector<8x128xf32>
    %83 = tpu.reciprocal %82 {approx = true} : vector<8x128xf32> -> vector<8x128xf32>
    %84 = arith.truncf %83 : vector<8x128xf32> to vector<8x128xbf16>
    %c0_50 = arith.constant 0 : index
    %c0_51 = arith.constant 0 : index
    %85 = vector.load %arg14[%c0_50, %c0_51] : memref<8x128xbf16, #tpu.memory_space<vmem>>, vector<8x128xbf16>
    tpu.vector_store %arg14[%c0_50, %c0_51], %84 {strides = array<i32>} : memref<8x128xbf16, #tpu.memory_space<vmem>>, vector<8x128xbf16>,
    return
  }
  func.func @transform_0(%arg0: i32) -> (i32, i32) {
    %c0_i32 = arith.constant 0 : i32
    %c0_i32_0 = arith.constant 0 : i32
    return %arg0, %c0_i32 : i32, i32
  }
  func.func @transform_1(%arg0: i32) -> (i32, i32) {
    %c0_i32 = arith.constant 0 : i32
    %c0_i32_0 = arith.constant 0 : i32
    %c0_i32_1 = arith.constant 0 : i32
    return %c0_i32, %c0_i32_0 : i32, i32
  }
  func.func @transform_2(%arg0: i32) -> (i32, i32) {
    %c0_i32 = arith.constant 0 : i32
    %c0_i32_0 = arith.constant 0 : i32
    %c0_i32_1 = arith.constant 0 : i32
    return %c0_i32, %c0_i32_0 : i32, i32
  }
  func.func @transform_3(%arg0: i32) -> (i32, i32) {
    %c0_i32 = arith.constant 0 : i32
    %c0_i32_0 = arith.constant 0 : i32
    %c0_i32_1 = arith.constant 0 : i32
    return %c0_i32, %c0_i32_0 : i32, i32
  }
  func.func @transform_4(%arg0: i32) -> (i32, i32) {
    %c0_i32 = arith.constant 0 : i32
    %c0_i32_0 = arith.constant 0 : i32
    %c0_i32_1 = arith.constant 0 : i32
    return %c0_i32, %c0_i32_0 : i32, i32
  }
  func.func @transform_5(%arg0: i32) -> (i32, i32) {
    %c0_i32 = arith.constant 0 : i32
    %c0_i32_0 = arith.constant 0 : i32
    %c0_i32_1 = arith.constant 0 : i32
    return %c0_i32, %c0_i32_0 : i32, i32
  }
  func.func @transform_6(%arg0: i32) -> (i32, i32) {
    %c0_i32 = arith.constant 0 : i32
    %c0_i32_0 = arith.constant 0 : i32
    %c0_i32_1 = arith.constant 0 : i32
    return %c0_i32, %c0_i32_0 : i32, i32
  }
  func.func @transform_7(%arg0: i32) -> (i32, i32) {
    %c0_i32 = arith.constant 0 : i32
    %c0_i32_0 = arith.constant 0 : i32
    %c0_i32_1 = arith.constant 0 : i32
    return %c0_i32, %c0_i32_0 : i32, i32
  }
  func.func @transform_8(%arg0: i32) -> (i32, i32) {
    %c0_i32 = arith.constant 0 : i32
    %c0_i32_0 = arith.constant 0 : i32
    %c0_i32_1 = arith.constant 0 : i32
    return %c0_i32, %c0_i32_0 : i32, i32
  }
  func.func @transform_9(%arg0: i32) -> (i32, i32) {
    %c0_i32 = arith.constant 0 : i32
    %c0_i32_0 = arith.constant 0 : i32
    %c0_i32_1 = arith.constant 0 : i32
    return %c0_i32, %c0_i32_0 : i32, i32
  }
  func.func @transform_10(%arg0: i32) -> (i32, i32) {
    %c0_i32 = arith.constant 0 : i32
    %c0_i32_0 = arith.constant 0 : i32
    %c0_i32_1 = arith.constant 0 : i32
    return %c0_i32, %c0_i32_0 : i32, i32
  }
  func.func @transform_11(%arg0: i32) -> (i32, i32) {
    %c0_i32 = arith.constant 0 : i32
    %c0_i32_0 = arith.constant 0 : i32
    %c0_i32_1 = arith.constant 0 : i32
    return %c0_i32, %c0_i32_0 : i32, i32
  }
  func.func @transform_12(%arg0: i32) -> (i32, i32) {
    %c0_i32 = arith.constant 0 : i32
    %c0_i32_0 = arith.constant 0 : i32
    %c0_i32_1 = arith.constant 0 : i32
    return %c0_i32, %c0_i32_0 : i32, i32
  }
  func.func @transform_13(%arg0: i32) -> (i32, i32) {
    %c0_i32 = arith.constant 0 : i32
    %c0_i32_0 = arith.constant 0 : i32
    return %arg0, %c0_i32 : i32, i32
  }
  func.func @transform_14(%arg0: i32) -> (i32, i32) {
    %c0_i32 = arith.constant 0 : i32
    %c0_i32_0 = arith.constant 0 : i32
    return %arg0, %c0_i32 : i32, i32
  }
}

</mosaic_0001>

<llo_original>
// kernel: _forward_impl.1
$region0: #{_forward_impl.1}
  #allocation0 [shape = 'u32[]', space=smem, size = 0x4, offset = 0x4, fixed_abs, tag = 'smem constant byte address 0x4 - core index']
  #allocation1 [shape = 'u32[72,128]{1,0:T(1,128)}', space=vmem, size = 0x9000, scoped, tag = 'internal scratch']
  %s0 = inlined_call_operand.vmem [shape: bf16[8,128], index: 0, kind: input, shape index: {}]
  %s1 = inlined_call_operand.hbm [shape: bf16[128,128], index: 1, kind: input, shape index: {}]
  %s2 = inlined_call_operand.vmem [shape: f32[1,128], index: 2, kind: input, shape index: {}]
  %s3 = inlined_call_operand.hbm [shape: bf16[128,128], index: 3, kind: input, shape index: {}]
  %s4 = inlined_call_operand.vmem [shape: f32[1,128], index: 4, kind: input, shape index: {}]
  %s5 = inlined_call_operand.hbm [shape: bf16[128,128], index: 5, kind: input, shape index: {}]
  %s6 = inlined_call_operand.vmem [shape: f32[1,128], index: 6, kind: input, shape index: {}]
  %s7 = inlined_call_operand.hbm [shape: bf16[128,128], index: 7, kind: input, shape index: {}]
  %s8 = inlined_call_operand.vmem [shape: f32[1,128], index: 8, kind: input, shape index: {}]
  %s9 = inlined_call_operand.hbm [shape: bf16[128,128], index: 9, kind: input, shape index: {}]
  %s10 = inlined_call_operand.vmem [shape: f32[1,128], index: 10, kind: input, shape index: {}]
  %s11 = inlined_call_operand.hbm [shape: bf16[128,128], index: 11, kind: input, shape index: {}]
  %s12 = inlined_call_operand.vmem [shape: f32[1,128], index: 12, kind: input, shape index: {}]
  %s13 = inlined_call_operand.hbm [shape: bf16[8,128], index: 13, kind: output, shape index: {0}]
  %s14 = inlined_call_operand.hbm [shape: bf16[8,128], index: 14, kind: output, shape index: {1}]
  %15 = xla_tuple %s13, %s14
  %s16 = sld [smem:[#allocation0]]
  $region94: #{_forward_impl.1} parent=0
    _
  %s18 = ssub.s32 1, %s16
  %s19 = scalar_select 0, %s18, %s16
  $region1: #{_forward_impl.1} parent=0
    #allocation2 [shape = 'u8[32768]{0}', space=vmem, size = 0x8000, scoped, tag = 'input window, operand 1, single buffered']
    #allocation3 [shape = 's32[1]{0}', space=sflag, size = 0x4, scoped, tag = 'scoped memory for _forward_impl.1']
    #allocation4 [shape = 's32[1]{0}', space=sflag, size = 0x4, scoped, tag = 'scoped memory for _forward_impl.1']
    #allocation5 [shape = 'u8[32768]{0}', space=vmem, size = 0x8000, scoped, tag = 'input window, operand 3, single buffered']
    #allocation6 [shape = 's32[1]{0}', space=sflag, size = 0x4, scoped, tag = 'scoped memory for _forward_impl.1']
    #allocation7 [shape = 'u8[32768]{0}', space=vmem, size = 0x8000, scoped, tag = 'input window, operand 5, single buffered']
    #allocation8 [shape = 'u8[32768]{0}', space=vmem, size = 0x8000, scoped, tag = 'input window, operand 7, single buffered']
    #allocation9 [shape = 's32[1]{0}', space=sflag, size = 0x4, scoped, tag = 'scoped memory for _forward_impl.1']
    #allocation10 [shape = 'u8[32768]{0}', space=vmem, size = 0x8000, scoped, tag = 'input window, operand 9, single buffered']
    #allocation11 [shape = 'u8[32768]{0}', space=vmem, size = 0x8000, scoped, tag = 'input window, operand 11, single buffered']
    #allocation12 [shape = 's32[1]{0}', space=sflag, size = 0x4, scoped, tag = 'scoped memory for _forward_impl.1']
    #allocation13 [shape = 'u8[2048]{0}', space=vmem, size = 0x800, scoped, tag = 'output window, operand 0, single buffered']
    #allocation14 [shape = 'u8[2048]{0}', space=vmem, size = 0x800, scoped, tag = 'output window, operand 1, single buffered']
    #allocation15 [shape = 's32[1]{0}', space=sflag, size = 0x4, scoped, tag = 'scoped memory for _forward_impl.1']
    %20 = vsyncpa [#allocation3], 0
    %21 = vsyncpa [#allocation6], 0
    %22 = vsyncpa [#allocation9], 0
    %23 = vsyncpa [#allocation12], 0
    %24 = vsyncpa [#allocation4], 0
    %25 = vsyncpa [#allocation15], 0
    // Predicated region
    $region2: #{_forward_impl.1} parent=1 // pred_check
      _
    $region3: #{_forward_impl.1} parent=1 // pred_check_branch
      %27 = sbr.rel (0) target = $region5
    $region4: #{_forward_impl.1} parent=1 // pred_region
      _
    $region5: #{_forward_impl.1} parent=1 // pred_fallthru
      _
    // Predicated region
    $region6: #{_forward_impl.1} parent=1 // pred_check
      _
    $region7: #{_forward_impl.1} parent=1 // pred_check_branch
      %29 = sbr.rel (0) target = $region9
    $region8: #{_forward_impl.1} parent=1 // pred_region
      %31 = vsyncadd [#allocation3], 0
      %s32 = sshll.u32 %s1, 4
      %s33 = int_to_ptr.hbm [resolvable:$true] %s32
      %s34 = sshll.u32 [#allocation2], 4
      %s35 = int_to_ptr.vmem [resolvable:$true] %s34
      %40 = dma.hbm_to_vmem [thread:$0]  %s33, 1024, %s35, [#allocation3], 64, 64, 4
    $region9: #{_forward_impl.1} parent=1 // pred_fallthru
      _
    // Predicated region
    $region10: #{_forward_impl.1} parent=1 // pred_check
      _
    $region11: #{_forward_impl.1} parent=1 // pred_check_branch
      %42 = sbr.rel (0) target = $region13
    $region12: #{_forward_impl.1} parent=1 // pred_region
      _
    $region13: #{_forward_impl.1} parent=1 // pred_fallthru
      _
    // Predicated region
    $region14: #{_forward_impl.1} parent=1 // pred_check
      _
    $region15: #{_forward_impl.1} parent=1 // pred_check_branch
      %44 = sbr.rel (0) target = $region17
    $region16: #{_forward_impl.1} parent=1 // pred_region
      %46 = vsyncadd [#allocation6], 0
      %s47 = sshll.u32 %s3, 4
      %s48 = int_to_ptr.hbm [resolvable:$true] %s47
      %s49 = sshll.u32 [#allocation5], 4
      %s50 = int_to_ptr.vmem [resolvable:$true] %s49
      %55 = dma.hbm_to_vmem [thread:$0]  %s48, 1024, %s50, [#allocation6], 64, 64, 4
    $region17: #{_forward_impl.1} parent=1 // pred_fallthru
      _
    // Predicated region
    $region18: #{_forward_impl.1} parent=1 // pred_check
      _
    $region19: #{_forward_impl.1} parent=1 // pred_check_branch
      %57 = sbr.rel (0) target = $region21
    $region20: #{_forward_impl.1} parent=1 // pred_region
      _
    $region21: #{_forward_impl.1} parent=1 // pred_fallthru
      _
    // Predicated region
    $region22: #{_forward_impl.1} parent=1 // pred_check
      _
    $region23: #{_forward_impl.1} parent=1 // pred_check_branch
      %59 = sbr.rel (0) target = $region25
    $region24: #{_forward_impl.1} parent=1 // pred_region
      %61 = vsyncadd [#allocation6], 0
      %s62 = sshll.u32 %s5, 4
      %s63 = int_to_ptr.hbm [resolvable:$true] %s62
      %s64 = sshll.u32 [#allocation7], 4
      %s65 = int_to_ptr.vmem [resolvable:$true] %s64
      %70 = dma.hbm_to_vmem [thread:$0]  %s63, 1024, %s65, [#allocation6], 64, 64, 4
    $region25: #{_forward_impl.1} parent=1 // pred_fallthru
      _
    // Predicated region
    $region26: #{_forward_impl.1} parent=1 // pred_check
      _
    $region27: #{_forward_impl.1} parent=1 // pred_check_branch
      %72 = sbr.rel (0) target = $region29
    $region28: #{_forward_impl.1} parent=1 // pred_region
      _
    $region29: #{_forward_impl.1} parent=1 // pred_fallthru
      _
    // Predicated region
    $region30: #{_forward_impl.1} parent=1 // pred_check
      _
    $region31: #{_forward_impl.1} parent=1 // pred_check_branch
      %74 = sbr.rel (0) target = $region33
    $region32: #{_forward_impl.1} parent=1 // pred_region
      %76 = vsyncadd [#allocation9], 0
      %s77 = sshll.u32 %s7, 4
      %s78 = int_to_ptr.hbm [resolvable:$true] %s77
      %s79 = sshll.u32 [#allocation8], 4
      %s80 = int_to_ptr.vmem [resolvable:$true] %s79
      %85 = dma.hbm_to_vmem [thread:$0]  %s78, 1024, %s80, [#allocation9], 64, 64, 4
    $region33: #{_forward_impl.1} parent=1 // pred_fallthru
      _
    // Predicated region
    $region34: #{_forward_impl.1} parent=1 // pred_check
      _
    $region35: #{_forward_impl.1} parent=1 // pred_check_branch
      %87 = sbr.rel (0) target = $region37
    $region36: #{_forward_impl.1} parent=1 // pred_region
      _
    $region37: #{_forward_impl.1} parent=1 // pred_fallthru
      _
    // Predicated region
    $region38: #{_forward_impl.1} parent=1 // pred_check
      _
    $region39: #{_forward_impl.1} parent=1 // pred_check_branch
      %89 = sbr.rel (0) target = $region41
    $region40: #{_forward_impl.1} parent=1 // pred_region
      %91 = vsyncadd [#allocation9], 0
      %s92 = sshll.u32 %s9, 4
      %s93 = int_to_ptr.hbm [resolvable:$true] %s92
      %s94 = sshll.u32 [#allocation10], 4
      %s95 = int_to_ptr.vmem [resolvable:$true] %s94
      %100 = dma.hbm_to_vmem [thread:$0]  %s93, 1024, %s95, [#allocation9], 64, 64, 4
    $region41: #{_forward_impl.1} parent=1 // pred_fallthru
      _
    // Predicated region
    $region42: #{_forward_impl.1} parent=1 // pred_check
      _
    $region43: #{_forward_impl.1} parent=1 // pred_check_branch
      %102 = sbr.rel (0) target = $region45
    $region44: #{_forward_impl.1} parent=1 // pred_region
      _
    $region45: #{_forward_impl.1} parent=1 // pred_fallthru
      _
    // Predicated region
    $region46: #{_forward_impl.1} parent=1 // pred_check
      _
    $region47: #{_forward_impl.1} parent=1 // pred_check_branch
      %104 = sbr.rel (0) target = $region49
    $region48: #{_forward_impl.1} parent=1 // pred_region
      %106 = vsyncadd [#allocation12], 0
      %s107 = sshll.u32 %s11, 4
      %s108 = int_to_ptr.hbm [resolvable:$true] %s107
      %s109 = sshll.u32 [#allocation11], 4
      %s110 = int_to_ptr.vmem [resolvable:$true] %s109
      %115 = dma.hbm_to_vmem [thread:$0]  %s108, 1024, %s110, [#allocation12], 64, 64, 4
    $region49: #{_forward_impl.1} parent=1 // pred_fallthru
      _
    // Predicated region
    $region50: #{_forward_impl.1} parent=1 // pred_check
      _
    $region51: #{_forward_impl.1} parent=1 // pred_check_branch
      %117 = sbr.rel (0) target = $region53
    $region52: #{_forward_impl.1} parent=1 // pred_region
      _
    $region53: #{_forward_impl.1} parent=1 // pred_fallthru
      _
    // Predicated region
    $region54: #{_forward_impl.1} parent=1 // pred_check
      _
    $region55: #{_forward_impl.1} parent=1 // pred_check_branch
      %119 = sbr.rel (0) target = $region57
    $region56: #{_forward_impl.1} parent=1 // pred_region
      %121 = dma.done [#allocation3], 1024
    $region57: #{_forward_impl.1} parent=1 // pred_fallthru
      _
    // Predicated region
    $region58: #{_forward_impl.1} parent=1 // pred_check
      _
    $region59: #{_forward_impl.1} parent=1 // pred_check_branch
      %123 = sbr.rel (0) target = $region61
    $region60: #{_forward_impl.1} parent=1 // pred_region
      %125 = dma.done [#allocation6], 1024
    $region61: #{_forward_impl.1} parent=1 // pred_fallthru
      _
    // Predicated region
    $region62: #{_forward_impl.1} parent=1 // pred_check
      _
    $region63: #{_forward_impl.1} parent=1 // pred_check_branch
      %127 = sbr.rel (0) target = $region65
    $region64: #{_forward_impl.1} parent=1 // pred_region
      %129 = dma.done [#allocation6], 1024
    $region65: #{_forward_impl.1} parent=1 // pred_fallthru
      _
    // Predicated region
    $region66: #{_forward_impl.1} parent=1 // pred_check
      _
    $region67: #{_forward_impl.1} parent=1 // pred_check_branch
      %131 = sbr.rel (0) target = $region69
    $region68: #{_forward_impl.1} parent=1 // pred_region
      %133 = dma.done [#allocation9], 1024
    $region69: #{_forward_impl.1} parent=1 // pred_fallthru
      _
    // Predicated region
    $region70: #{_forward_impl.1} parent=1 // pred_check
      _
    $region71: #{_forward_impl.1} parent=1 // pred_check_branch
      %135 = sbr.rel (0) target = $region73
    $region72: #{_forward_impl.1} parent=1 // pred_region
      %137 = dma.done [#allocation9], 1024
    $region73: #{_forward_impl.1} parent=1 // pred_fallthru
      _
    // Predicated region
    $region74: #{_forward_impl.1} parent=1 // pred_check
      _
    $region75: #{_forward_impl.1} parent=1 // pred_check_branch
      %139 = sbr.rel (0) target = $region77
    $region76: #{_forward_impl.1} parent=1 // pred_region
      %141 = dma.done [#allocation12], 1024
    $region77: #{_forward_impl.1} parent=1 // pred_fallthru
      _
    %v142 = vld [vmem:[%s0] sm:$0xf]
    %v143 = vld [vmem:[#allocation2] sm:$0xf]
    %v144 = vld [vmem:[#allocation2 + $0x4] sm:$0xf]
    %v145 = vld [vmem:[#allocation2 + $0x8] sm:$0xf]
    %v146 = vld [vmem:[#allocation2 + $0xc] sm:$0xf]
    %v147 = vld [vmem:[#allocation2 + $0x10] sm:$0xf]
    %v148 = vld [vmem:[#allocation2 + $0x14] sm:$0xf]
    %v149 = vld [vmem:[#allocation2 + $0x18] sm:$0xf]
    %v150 = vld [vmem:[#allocation2 + $0x1c] sm:$0xf]
    %v151 = vld [vmem:[#allocation2 + $0x20] sm:$0xf]
    %v152 = vld [vmem:[#allocation2 + $0x24] sm:$0xf]
    %v153 = vld [vmem:[#allocation2 + $0x28] sm:$0xf]
    %v154 = vld [vmem:[#allocation2 + $0x2c] sm:$0xf]
    %v155 = vld [vmem:[#allocation2 + $0x30] sm:$0xf]
    %v156 = vld [vmem:[#allocation2 + $0x34] sm:$0xf]
    %v157 = vld [vmem:[#allocation2 + $0x38] sm:$0xf]
    %v158 = vld [vmem:[#allocation2 + $0x3c] sm:$0xf]
    %v159 = vld [vmem:[%s2] sm:$0x1]
    %v161 = vperm.slane %v159, 0
    %v179 = vunpack.c.l.b16 %v143
    %v180 = vunpack.c.l.b16 %v144
    %v181 = vunpack.c.l.b16 %v145
    %v182 = vunpack.c.l.b16 %v146
    %v183 = vunpack.c.l.b16 %v147
    %v184 = vunpack.c.l.b16 %v148
    %v185 = vunpack.c.l.b16 %v149
    %v186 = vunpack.c.l.b16 %v150
    %v187 = vunpack.c.l.b16 %v151
    %v188 = vunpack.c.l.b16 %v152
    %v189 = vunpack.c.l.b16 %v153
    %v190 = vunpack.c.l.b16 %v154
    %v191 = vunpack.c.l.b16 %v155
    %v192 = vunpack.c.l.b16 %v156
    %v193 = vunpack.c.l.b16 %v157
    %v194 = vunpack.c.l.b16 %v158
    %v195 = vpack.c.b16 %v180, %v179
    %v196 = vpack.c.b16 %v182, %v181
    %v197 = vpack.c.b16 %v184, %v183
    %v198 = vpack.c.b16 %v186, %v185
    %v199 = vpack.c.b16 %v188, %v187
    %v200 = vpack.c.b16 %v190, %v189
    %v201 = vpack.c.b16 %v192, %v191
    %v202 = vpack.c.b16 %v194, %v193
    %211 = vmatpush.bf16.msra.mxu0 %v202
    %212 = vmatpush.bf16.msra.mxu0 %v201
    %213 = vmatpush.bf16.msra.mxu0 %v200
    %214 = vmatpush.bf16.msra.mxu0 %v199
    %215 = vmatpush.bf16.msra.mxu0 %v198
    %216 = vmatpush.bf16.msra.mxu0 %v197
    %217 = vmatpush.bf16.msra.mxu0 %v196
    %218 = vmatpush.bf16.msra.mxu0 %v195
    %219 = vmatmul.bf16.gmra.mxu0 %v142
    %v220 = vpop.f32.mrf.mxu0
    %v221 = vadd.f32 %v161, %v220
    %v222 = vpop.f32.mrf.mxu0
    %223 = vdwg.mxu0
    %v224 = vpack.c.bf16 %v221, %v221
    %v225 = vunpack.c.l.bf16 %v224
    %vm226 = vcmp.gt.f32.partialorder %v225, 0.0
    %v227 = vmul.f32 %v225, 1.442695
    %v228 = vpow.pop %v227
    %v229 = vpack.c.bf16 %v228, %v228
    %v230 = vunpack.c.l.bf16 %v229
    %v231 = vsub.f32 %v230, 1.0
    %v232 = vpack.c.bf16 %v231, %v231
    %v233 = vunpack.c.l.bf16 %v232
    %v234 = vmul.f32 %v233, 1.671875
    %v235 = vpack.c.bf16 %v234, %v234
    %vm236 = vmpackc.low %vm226, %vm226
    %v237 = vsel %vm236, %v224, %v235
    %v238 = vunpack.c.l.bf16 %v237
    %v239 = vmul.f32 %v238, 1.046875
    %v240 = vpack.c.bf16 %v239, %v239
    %v241 = vld [vmem:[#allocation5] sm:$0xf]
    %v242 = vld [vmem:[#allocation5 + $0x4] sm:$0xf]
    %v243 = vld [vmem:[#allocation5 + $0x8] sm:$0xf]
    %v244 = vld [vmem:[#allocation5 + $0xc] sm:$0xf]
    %v245 = vld [vmem:[#allocation5 + $0x10] sm:$0xf]
    %v246 = vld [vmem:[#allocation5 + $0x14] sm:$0xf]
    %v247 = vld [vmem:[#allocation5 + $0x18] sm:$0xf]
    %v248 = vld [vmem:[#allocation5 + $0x1c] sm:$0xf]
    %v249 = vld [vmem:[#allocation5 + $0x20] sm:$0xf]
    %v250 = vld [vmem:[#allocation5 + $0x24] sm:$0xf]
    %v251 = vld [vmem:[#allocation5 + $0x28] sm:$0xf]
    %v252 = vld [vmem:[#allocation5 + $0x2c] sm:$0xf]
    %v253 = vld [vmem:[#allocation5 + $0x30] sm:$0xf]
    %v254 = vld [vmem:[#allocation5 + $0x34] sm:$0xf]
    %v255 = vld [vmem:[#allocation5 + $0x38] sm:$0xf]
    %v256 = vld [vmem:[#allocation5 + $0x3c] sm:$0xf]
    %v257 = vld [vmem:[%s4] sm:$0x1]
    %v259 = vperm.slane %v257, 0
    %v277 = vunpack.c.l.b16 %v241
    %v278 = vunpack.c.l.b16 %v242
    %v279 = vunpack.c.l.b16 %v243
    %v280 = vunpack.c.l.b16 %v244
    %v281 = vunpack.c.l.b16 %v245
    %v282 = vunpack.c.l.b16 %v246
    %v283 = vunpack.c.l.b16 %v247
    %v284 = vunpack.c.l.b16 %v248
    %v285 = vunpack.c.l.b16 %v249
    %v286 = vunpack.c.l.b16 %v250
    %v287 = vunpack.c.l.b16 %v251
    %v288 = vunpack.c.l.b16 %v252
    %v289 = vunpack.c.l.b16 %v253
    %v290 = vunpack.c.l.b16 %v254
    %v291 = vunpack.c.l.b16 %v255
    %v292 = vunpack.c.l.b16 %v256
    %v293 = vpack.c.b16 %v278, %v277
    %v294 = vpack.c.b16 %v280, %v279
    %v295 = vpack.c.b16 %v282, %v281
    %v296 = vpack.c.b16 %v284, %v283
    %v297 = vpack.c.b16 %v286, %v285
    %v298 = vpack.c.b16 %v288, %v287
    %v299 = vpack.c.b16 %v290, %v289
    %v300 = vpack.c.b16 %v292, %v291
    %309 = vmatpush.bf16.msra.mxu0 %v300
    %310 = vmatpush.bf16.msra.mxu0 %v299
    %311 = vmatpush.bf16.msra.mxu0 %v298
    %312 = vmatpush.bf16.msra.mxu0 %v297
    %313 = vmatpush.bf16.msra.mxu0 %v296
    %314 = vmatpush.bf16.msra.mxu0 %v295
    %315 = vmatpush.bf16.msra.mxu0 %v294
    %316 = vmatpush.bf16.msra.mxu0 %v293
    %317 = vmatmul.bf16.gmra.mxu0 %v240
    %v318 = vpop.f32.mrf.mxu0
    %v319 = vadd.f32 %v259, %v318
    %v320 = vpop.f32.mrf.mxu0
    %321 = vdwg.mxu0
    %v322 = vpack.c.bf16 %v319, %v319
    %v323 = vunpack.c.l.bf16 %v322
    %vm324 = vcmp.gt.f32.partialorder %v323, 0.0
    %v325 = vmul.f32 %v323, 1.442695
    %v326 = vpow.pop %v325
    %v327 = vpack.c.bf16 %v326, %v326
    %v328 = vunpack.c.l.bf16 %v327
    %v329 = vsub.f32 %v328, 1.0
    %v330 = vpack.c.bf16 %v329, %v329
    %v331 = vunpack.c.l.bf16 %v330
    %v332 = vmul.f32 %v331, 1.671875
    %v333 = vpack.c.bf16 %v332, %v332
    %vm334 = vmpackc.low %vm324, %vm324
    %v335 = vsel %vm334, %v322, %v333
    %v336 = vunpack.c.l.bf16 %v335
    %v337 = vmul.f32 %v336, 1.046875
    %v338 = vpack.c.bf16 %v337, %v337
    %v339 = vld [vmem:[#allocation7] sm:$0xf]
    %v340 = vld [vmem:[#allocation7 + $0x4] sm:$0xf]
    %v341 = vld [vmem:[#allocation7 + $0x8] sm:$0xf]
    %v342 = vld [vmem:[#allocation7 + $0xc] sm:$0xf]
    %v343 = vld [vmem:[#allocation7 + $0x10] sm:$0xf]
    %v344 = vld [vmem:[#allocation7 + $0x14] sm:$0xf]
    %v345 = vld [vmem:[#allocation7 + $0x18] sm:$0xf]
    %v346 = vld [vmem:[#allocation7 + $0x1c] sm:$0xf]
    %v347 = vld [vmem:[#allocation7 + $0x20] sm:$0xf]
    %v348 = vld [vmem:[#allocation7 + $0x24] sm:$0xf]
    %v349 = vld [vmem:[#allocation7 + $0x28] sm:$0xf]
    %v350 = vld [vmem:[#allocation7 + $0x2c] sm:$0xf]
    %v351 = vld [vmem:[#allocation7 + $0x30] sm:$0xf]
    %v352 = vld [vmem:[#allocation7 + $0x34] sm:$0xf]
    %v353 = vld [vmem:[#allocation7 + $0x38] sm:$0xf]
    %v354 = vld [vmem:[#allocation7 + $0x3c] sm:$0xf]
    %v355 = vld [vmem:[%s6] sm:$0x1]
    %v357 = vperm.slane %v355, 0
    %v375 = vunpack.c.l.b16 %v339
    %v376 = vunpack.c.l.b16 %v340
    %v377 = vunpack.c.l.b16 %v341
    %v378 = vunpack.c.l.b16 %v342
    %v379 = vunpack.c.l.b16 %v343
    %v380 = vunpack.c.l.b16 %v344
    %v381 = vunpack.c.l.b16 %v345
    %v382 = vunpack.c.l.b16 %v346
    %v383 = vunpack.c.l.b16 %v347
    %v384 = vunpack.c.l.b16 %v348
    %v385 = vunpack.c.l.b16 %v349
    %v386 = vunpack.c.l.b16 %v350
    %v387 = vunpack.c.l.b16 %v351
    %v388 = vunpack.c.l.b16 %v352
    %v389 = vunpack.c.l.b16 %v353
    %v390 = vunpack.c.l.b16 %v354
    %v391 = vpack.c.b16 %v376, %v375
    %v392 = vpack.c.b16 %v378, %v377
    %v393 = vpack.c.b16 %v380, %v379
    %v394 = vpack.c.b16 %v382, %v381
    %v395 = vpack.c.b16 %v384, %v383
    %v396 = vpack.c.b16 %v386, %v385
    %v397 = vpack.c.b16 %v388, %v387
    %v398 = vpack.c.b16 %v390, %v389
    %407 = vmatpush.bf16.msra.mxu0 %v398
    %408 = vmatpush.bf16.msra.mxu0 %v397
    %409 = vmatpush.bf16.msra.mxu0 %v396
    %410 = vmatpush.bf16.msra.mxu0 %v395
    %411 = vmatpush.bf16.msra.mxu0 %v394
    %412 = vmatpush.bf16.msra.mxu0 %v393
    %413 = vmatpush.bf16.msra.mxu0 %v392
    %414 = vmatpush.bf16.msra.mxu0 %v391
    %415 = vmatmul.bf16.gmra.mxu0 %v338
    %v416 = vpop.f32.mrf.mxu0
    %v417 = vadd.f32 %v357, %v416
    %v418 = vpop.f32.mrf.mxu0
    %419 = vdwg.mxu0
    %v420 = vpack.c.bf16 %v417, %v417
    %421 = vst [vmem:[#allocation14] sm:$0xf] %v420
    %v422 = vld [vmem:[#allocation8] sm:$0xf]
    %v423 = vld [vmem:[#allocation8 + $0x4] sm:$0xf]
    %v424 = vld [vmem:[#allocation8 + $0x8] sm:$0xf]
    %v425 = vld [vmem:[#allocation8 + $0xc] sm:$0xf]
    %v426 = vld [vmem:[#allocation8 + $0x10] sm:$0xf]
    %v427 = vld [vmem:[#allocation8 + $0x14] sm:$0xf]
    %v428 = vld [vmem:[#allocation8 + $0x18] sm:$0xf]
    %v429 = vld [vmem:[#allocation8 + $0x1c] sm:$0xf]
    %v430 = vld [vmem:[#allocation8 + $0x20] sm:$0xf]
    %v431 = vld [vmem:[#allocation8 + $0x24] sm:$0xf]
    %v432 = vld [vmem:[#allocation8 + $0x28] sm:$0xf]
    %v433 = vld [vmem:[#allocation8 + $0x2c] sm:$0xf]
    %v434 = vld [vmem:[#allocation8 + $0x30] sm:$0xf]
    %v435 = vld [vmem:[#allocation8 + $0x34] sm:$0xf]
    %v436 = vld [vmem:[#allocation8 + $0x38] sm:$0xf]
    %v437 = vld [vmem:[#allocation8 + $0x3c] sm:$0xf]
    %v438 = vld [vmem:[%s8] sm:$0x1]
    %v440 = vperm.slane %v438, 0
    %v458 = vunpack.c.l.b16 %v422
    %v459 = vunpack.c.l.b16 %v423
    %v460 = vunpack.c.l.b16 %v424
    %v461 = vunpack.c.l.b16 %v425
    %v462 = vunpack.c.l.b16 %v426
    %v463 = vunpack.c.l.b16 %v427
    %v464 = vunpack.c.l.b16 %v428
    %v465 = vunpack.c.l.b16 %v429
    %v466 = vunpack.c.l.b16 %v430
    %v467 = vunpack.c.l.b16 %v431
    %v468 = vunpack.c.l.b16 %v432
    %v469 = vunpack.c.l.b16 %v433
    %v470 = vunpack.c.l.b16 %v434
    %v471 = vunpack.c.l.b16 %v435
    %v472 = vunpack.c.l.b16 %v436
    %v473 = vunpack.c.l.b16 %v437
    %v474 = vpack.c.b16 %v459, %v458
    %v475 = vpack.c.b16 %v461, %v460
    %v476 = vpack.c.b16 %v463, %v462
    %v477 = vpack.c.b16 %v465, %v464
    %v478 = vpack.c.b16 %v467, %v466
    %v479 = vpack.c.b16 %v469, %v468
    %v480 = vpack.c.b16 %v471, %v470
    %v481 = vpack.c.b16 %v473, %v472
    %490 = vmatpush.bf16.msra.mxu0 %v481
    %491 = vmatpush.bf16.msra.mxu0 %v480
    %492 = vmatpush.bf16.msra.mxu0 %v479
    %493 = vmatpush.bf16.msra.mxu0 %v478
    %494 = vmatpush.bf16.msra.mxu0 %v477
    %495 = vmatpush.bf16.msra.mxu0 %v476
    %496 = vmatpush.bf16.msra.mxu0 %v475
    %497 = vmatpush.bf16.msra.mxu0 %v474
    %498 = vmatmul.bf16.gmra.mxu0 %v420
    %v499 = vpop.f32.mrf.mxu0
    %v500 = vadd.f32 %v440, %v499
    %v501 = vpop.f32.mrf.mxu0
    %502 = vdwg.mxu0
    %v503 = vpack.c.bf16 %v500, %v500
    %v504 = vunpack.c.l.bf16 %v503
    %vm505 = vcmp.gt.f32.partialorder %v504, 0.0
    %v506 = vmul.f32 %v504, 1.442695
    %v507 = vpow.pop %v506
    %v508 = vpack.c.bf16 %v507, %v507
    %v509 = vunpack.c.l.bf16 %v508
    %v510 = vsub.f32 %v509, 1.0
    %v511 = vpack.c.bf16 %v510, %v510
    %v512 = vunpack.c.l.bf16 %v511
    %v513 = vmul.f32 %v512, 1.671875
    %v514 = vpack.c.bf16 %v513, %v513
    %vm515 = vmpackc.low %vm505, %vm505
    %v516 = vsel %vm515, %v503, %v514
    %v517 = vunpack.c.l.bf16 %v516
    %v518 = vmul.f32 %v517, 1.046875
    %v519 = vpack.c.bf16 %v518, %v518
    %v520 = vld [vmem:[#allocation10] sm:$0xf]
    %v521 = vld [vmem:[#allocation10 + $0x4] sm:$0xf]
    %v522 = vld [vmem:[#allocation10 + $0x8] sm:$0xf]
    %v523 = vld [vmem:[#allocation10 + $0xc] sm:$0xf]
    %v524 = vld [vmem:[#allocation10 + $0x10] sm:$0xf]
    %v525 = vld [vmem:[#allocation10 + $0x14] sm:$0xf]
    %v526 = vld [vmem:[#allocation10 + $0x18] sm:$0xf]
    %v527 = vld [vmem:[#allocation10 + $0x1c] sm:$0xf]
    %v528 = vld [vmem:[#allocation10 + $0x20] sm:$0xf]
    %v529 = vld [vmem:[#allocation10 + $0x24] sm:$0xf]
    %v530 = vld [vmem:[#allocation10 + $0x28] sm:$0xf]
    %v531 = vld [vmem:[#allocation10 + $0x2c] sm:$0xf]
    %v532 = vld [vmem:[#allocation10 + $0x30] sm:$0xf]
    %v533 = vld [vmem:[#allocation10 + $0x34] sm:$0xf]
    %v534 = vld [vmem:[#allocation10 + $0x38] sm:$0xf]
    %v535 = vld [vmem:[#allocation10 + $0x3c] sm:$0xf]
    %v536 = vld [vmem:[%s10] sm:$0x1]
    %v538 = vperm.slane %v536, 0
    %v556 = vunpack.c.l.b16 %v520
    %v557 = vunpack.c.l.b16 %v521
    %v558 = vunpack.c.l.b16 %v522
    %v559 = vunpack.c.l.b16 %v523
    %v560 = vunpack.c.l.b16 %v524
    %v561 = vunpack.c.l.b16 %v525
    %v562 = vunpack.c.l.b16 %v526
    %v563 = vunpack.c.l.b16 %v527
    %v564 = vunpack.c.l.b16 %v528
    %v565 = vunpack.c.l.b16 %v529
    %v566 = vunpack.c.l.b16 %v530
    %v567 = vunpack.c.l.b16 %v531
    %v568 = vunpack.c.l.b16 %v532
    %v569 = vunpack.c.l.b16 %v533
    %v570 = vunpack.c.l.b16 %v534
    %v571 = vunpack.c.l.b16 %v535
    %v572 = vpack.c.b16 %v557, %v556
    %v573 = vpack.c.b16 %v559, %v558
    %v574 = vpack.c.b16 %v561, %v560
    %v575 = vpack.c.b16 %v563, %v562
    %v576 = vpack.c.b16 %v565, %v564
    %v577 = vpack.c.b16 %v567, %v566
    %v578 = vpack.c.b16 %v569, %v568
    %v579 = vpack.c.b16 %v571, %v570
    %588 = vmatpush.bf16.msra.mxu0 %v579
    %589 = vmatpush.bf16.msra.mxu0 %v578
    %590 = vmatpush.bf16.msra.mxu0 %v577
    %591 = vmatpush.bf16.msra.mxu0 %v576
    %592 = vmatpush.bf16.msra.mxu0 %v575
    %593 = vmatpush.bf16.msra.mxu0 %v574
    %594 = vmatpush.bf16.msra.mxu0 %v573
    %595 = vmatpush.bf16.msra.mxu0 %v572
    %596 = vmatmul.bf16.gmra.mxu0 %v519
    %v597 = vpop.f32.mrf.mxu0
    %v598 = vadd.f32 %v538, %v597
    %v599 = vpop.f32.mrf.mxu0
    %600 = vdwg.mxu0
    %v601 = vpack.c.bf16 %v598, %v598
    %v602 = vunpack.c.l.bf16 %v601
    %vm603 = vcmp.gt.f32.partialorder %v602, 0.0
    %v604 = vmul.f32 %v602, 1.442695
    %v605 = vpow.pop %v604
    %v606 = vpack.c.bf16 %v605, %v605
    %v607 = vunpack.c.l.bf16 %v606
    %v608 = vsub.f32 %v607, 1.0
    %v609 = vpack.c.bf16 %v608, %v608
    %v610 = vunpack.c.l.bf16 %v609
    %v611 = vmul.f32 %v610, 1.671875
    %v612 = vpack.c.bf16 %v611, %v611
    %vm613 = vmpackc.low %vm603, %vm603
    %v614 = vsel %vm613, %v601, %v612
    %v615 = vunpack.c.l.bf16 %v614
    %v616 = vmul.f32 %v615, 1.046875
    %v617 = vpack.c.bf16 %v616, %v616
    %v618 = vld [vmem:[#allocation11] sm:$0xf]
    %v619 = vld [vmem:[#allocation11 + $0x4] sm:$0xf]
    %v620 = vld [vmem:[#allocation11 + $0x8] sm:$0xf]
    %v621 = vld [vmem:[#allocation11 + $0xc] sm:$0xf]
    %v622 = vld [vmem:[#allocation11 + $0x10] sm:$0xf]
    %v623 = vld [vmem:[#allocation11 + $0x14] sm:$0xf]
    %v624 = vld [vmem:[#allocation11 + $0x18] sm:$0xf]
    %v625 = vld [vmem:[#allocation11 + $0x1c] sm:$0xf]
    %v626 = vld [vmem:[#allocation11 + $0x20] sm:$0xf]
    %v627 = vld [vmem:[#allocation11 + $0x24] sm:$0xf]
    %v628 = vld [vmem:[#allocation11 + $0x28] sm:$0xf]
    %v629 = vld [vmem:[#allocation11 + $0x2c] sm:$0xf]
    %v630 = vld [vmem:[#allocation11 + $0x30] sm:$0xf]
    %v631 = vld [vmem:[#allocation11 + $0x34] sm:$0xf]
    %v632 = vld [vmem:[#allocation11 + $0x38] sm:$0xf]
    %v633 = vld [vmem:[#allocation11 + $0x3c] sm:$0xf]
    %v634 = vld [vmem:[%s12] sm:$0x1]
    %v636 = vperm.slane %v634, 0
    %v654 = vunpack.c.l.b16 %v618
    %v655 = vunpack.c.l.b16 %v619
    %v656 = vunpack.c.l.b16 %v620
    %v657 = vunpack.c.l.b16 %v621
    %v658 = vunpack.c.l.b16 %v622
    %v659 = vunpack.c.l.b16 %v623
    %v660 = vunpack.c.l.b16 %v624
    %v661 = vunpack.c.l.b16 %v625
    %v662 = vunpack.c.l.b16 %v626
    %v663 = vunpack.c.l.b16 %v627
    %v664 = vunpack.c.l.b16 %v628
    %v665 = vunpack.c.l.b16 %v629
    %v666 = vunpack.c.l.b16 %v630
    %v667 = vunpack.c.l.b16 %v631
    %v668 = vunpack.c.l.b16 %v632
    %v669 = vunpack.c.l.b16 %v633
    %v670 = vpack.c.b16 %v655, %v654
    %v671 = vpack.c.b16 %v657, %v656
    %v672 = vpack.c.b16 %v659, %v658
    %v673 = vpack.c.b16 %v661, %v660
    %v674 = vpack.c.b16 %v663, %v662
    %v675 = vpack.c.b16 %v665, %v664
    %v676 = vpack.c.b16 %v667, %v666
    %v677 = vpack.c.b16 %v669, %v668
    %686 = vmatpush.bf16.msra.mxu0 %v677
    %687 = vmatpush.bf16.msra.mxu0 %v676
    %688 = vmatpush.bf16.msra.mxu0 %v675
    %689 = vmatpush.bf16.msra.mxu0 %v674
    %690 = vmatpush.bf16.msra.mxu0 %v673
    %691 = vmatpush.bf16.msra.mxu0 %v672
    %692 = vmatpush.bf16.msra.mxu0 %v671
    %693 = vmatpush.bf16.msra.mxu0 %v670
    %694 = vmatmul.bf16.gmra.mxu0 %v617
    %v695 = vpop.f32.mrf.mxu0
    %v696 = vadd.f32 %v636, %v695
    %v697 = vpop.f32.mrf.mxu0
    %698 = vdwg.mxu0
    %v699 = vsub.f32 0.0, %v696
    %v700 = vmul.f32 %v699, 1.442695
    %v701 = vpow.pop %v700
    %v702 = vadd.f32 %v701, 1.0
    %v703 = vrcp.pop %v702
    %v704 = vpack.c.bf16 %v703, %v703
    %705 = vst [vmem:[#allocation13] sm:$0xf] %v704
    // Predicated region
    $region78: #{_forward_impl.1} parent=1 // pred_check
      _
    $region79: #{_forward_impl.1} parent=1 // pred_check_branch
      %707 = sbr.rel (0) target = $region81
    $region80: #{_forward_impl.1} parent=1 // pred_region
      %709 = vsyncadd [#allocation4], 0
      %s711 = sshll.u32 [#allocation13], 4
      %s712 = int_to_ptr.vmem [resolvable:$true] %s711
      %s713 = sshll.u32 %s13, 4
      %s714 = int_to_ptr.hbm [resolvable:$true] %s713
      %716 = dma.vmem_to_hbm [thread:$0]  %s712, 64, %s714, [#allocation4]
    $region81: #{_forward_impl.1} parent=1 // pred_fallthru
      _
    // Predicated region
    $region82: #{_forward_impl.1} parent=1 // pred_check
      _
    $region83: #{_forward_impl.1} parent=1 // pred_check_branch
      %718 = sbr.rel (0) target = $region85
    $region84: #{_forward_impl.1} parent=1 // pred_region
      %720 = vsyncadd [#allocation15], 0
      %s722 = sshll.u32 [#allocation14], 4
      %s723 = int_to_ptr.vmem [resolvable:$true] %s722
      %s724 = sshll.u32 %s14, 4
      %s725 = int_to_ptr.hbm [resolvable:$true] %s724
      %727 = dma.vmem_to_hbm [thread:$0]  %s723, 64, %s725, [#allocation15]
    $region85: #{_forward_impl.1} parent=1 // pred_fallthru
      _
    // Predicated region
    $region86: #{_forward_impl.1} parent=1 // pred_check
      _
    $region87: #{_forward_impl.1} parent=1 // pred_check_branch
      %729 = sbr.rel (0) target = $region89
    $region88: #{_forward_impl.1} parent=1 // pred_region
      %731 = dma.done [#allocation4], 64
    $region89: #{_forward_impl.1} parent=1 // pred_fallthru
      _
    // Predicated region
    $region90: #{_forward_impl.1} parent=1 // pred_check
      _
    $region91: #{_forward_impl.1} parent=1 // pred_check_branch
      %733 = sbr.rel (0) target = $region93
    $region92: #{_forward_impl.1} parent=1 // pred_region
      %735 = dma.done [#allocation15], 64
    $region93: #{_forward_impl.1} parent=1 // pred_fallthru
      _
    %736 = vsyncpa [#allocation3], 1
    %737 = vsyncpa [#allocation6], 1
    %738 = vsyncpa [#allocation9], 1
    %739 = vsyncpa [#allocation12], 1
    %740 = vsyncpa [#allocation4], 1
    %741 = vsyncpa [#allocation15], 1

// kernel: _forward_impl.1
$region0: #{_forward_impl.1}
  #allocation0 [shape = 'u32[]', space=smem, size = 0x4, offset = 0x4, fixed_abs, tag = 'smem constant byte address 0x4 - core index']
  #allocation1 [shape = 'u32[72,128]{1,0:T(1,128)}', space=vmem, size = 0x9000, scoped, tag = 'internal scratch']
  %s0 = inlined_call_operand.vmem [shape: bf16[8,128], index: 0, kind: input, shape index: {}]
  %s1 = inlined_call_operand.hbm [shape: bf16[128,128], index: 1, kind: input, shape index: {}]
  %s2 = inlined_call_operand.vmem [shape: f32[1,128], index: 2, kind: input, shape index: {}]
  %s3 = inlined_call_operand.hbm [shape: bf16[128,128], index: 3, kind: input, shape index: {}]
  %s4 = inlined_call_operand.vmem [shape: f32[1,128], index: 4, kind: input, shape index: {}]
  %s5 = inlined_call_operand.hbm [shape: bf16[128,128], index: 5, kind: input, shape index: {}]
  %s6 = inlined_call_operand.vmem [shape: f32[1,128], index: 6, kind: input, shape index: {}]
  %s7 = inlined_call_operand.hbm [shape: bf16[128,128], index: 7, kind: input, shape index: {}]
  %s8 = inlined_call_operand.vmem [shape: f32[1,128], index: 8, kind: input, shape index: {}]
  %s9 = inlined_call_operand.hbm [shape: bf16[128,128], index: 9, kind: input, shape index: {}]
  %s10 = inlined_call_operand.vmem [shape: f32[1,128], index: 10, kind: input, shape index: {}]
  %s11 = inlined_call_operand.hbm [shape: bf16[128,128], index: 11, kind: input, shape index: {}]
  %s12 = inlined_call_operand.vmem [shape: f32[1,128], index: 12, kind: input, shape index: {}]
  %s13 = inlined_call_operand.hbm [shape: bf16[8,128], index: 13, kind: output, shape index: {0}]
  %s14 = inlined_call_operand.hbm [shape: bf16[8,128], index: 14, kind: output, shape index: {1}]
  %15 = xla_tuple %s13, %s14
  %s16 = sld [smem:[#allocation0]]
  $region94: #{_forward_impl.1} parent=0
    _
  %s18 = ssub.s32 1, %s16
  %s19 = scalar_select 0, %s18, %s16
  $region1: #{_forward_impl.1} parent=0
    #allocation2 [shape = 'u8[32768]{0}', space=vmem, size = 0x8000, scoped, tag = 'input window, operand 1, single buffered']
    #allocation3 [shape = 's32[1]{0}', space=sflag, size = 0x4, scoped, tag = 'scoped memory for _forward_impl.1']
    #allocation4 [shape = 's32[1]{0}', space=sflag, size = 0x4, scoped, tag = 'scoped memory for _forward_impl.1']
    #allocation5 [shape = 'u8[32768]{0}', space=vmem, size = 0x8000, scoped, tag = 'input window, operand 3, single buffered']
    #allocation6 [shape = 's32[1]{0}', space=sflag, size = 0x4, scoped, tag = 'scoped memory for _forward_impl.1']
    #allocation7 [shape = 'u8[32768]{0}', space=vmem, size = 0x8000, scoped, tag = 'input window, operand 5, single buffered']
    #allocation8 [shape = 'u8[32768]{0}', space=vmem, size = 0x8000, scoped, tag = 'input window, operand 7, single buffered']
    #allocation9 [shape = 's32[1]{0}', space=sflag, size = 0x4, scoped, tag = 'scoped memory for _forward_impl.1']
    #allocation10 [shape = 'u8[32768]{0}', space=vmem, size = 0x8000, scoped, tag = 'input window, operand 9, single buffered']
    #allocation11 [shape = 'u8[32768]{0}', space=vmem, size = 0x8000, scoped, tag = 'input window, operand 11, single buffered']
    #allocation12 [shape = 's32[1]{0}', space=sflag, size = 0x4, scoped, tag = 'scoped memory for _forward_impl.1']
    #allocation13 [shape = 'u8[2048]{0}', space=vmem, size = 0x800, scoped, tag = 'output window, operand 0, single buffered']
    #allocation14 [shape = 'u8[2048]{0}', space=vmem, size = 0x800, scoped, tag = 'output window, operand 1, single buffered']
    #allocation15 [shape = 's32[1]{0}', space=sflag, size = 0x4, scoped, tag = 'scoped memory for _forward_impl.1']
    %20 = vsyncpa [#allocation3], 0
    %21 = vsyncpa [#allocation6], 0
    %22 = vsyncpa [#allocation9], 0
    %23 = vsyncpa [#allocation12], 0
    %24 = vsyncpa [#allocation4], 0
    %25 = vsyncpa [#allocation15], 0
    // Predicated region
    $region2: #{_forward_impl.1} parent=1 // pred_check
      _
    $region3: #{_forward_impl.1} parent=1 // pred_check_branch
      %27 = sbr.rel (0) target = $region5
    $region4: #{_forward_impl.1} parent=1 // pred_region
      _
    $region5: #{_forward_impl.1} parent=1 // pred_fallthru
      _
    // Predicated region
    $region6: #{_forward_impl.1} parent=1 // pred_check
      _
    $region7: #{_forward_impl.1} parent=1 // pred_check_branch
      %29 = sbr.rel (0) target = $region9
    $region8: #{_forward_impl.1} parent=1 // pred_region
      %31 = vsyncadd [#allocation3], 0
      %s32 = sshll.u32 %s1, 4
      %s33 = int_to_ptr.hbm [resolvable:$true] %s32
      %s34 = sshll.u32 [#allocation2], 4
      %s35 = int_to_ptr.vmem [resolvable:$true] %s34
      %40 = dma.hbm_to_vmem [thread:$0]  %s33, 1024, %s35, [#allocation3], 64, 64, 4
    $region9: #{_forward_impl.1} parent=1 // pred_fallthru
      _
    // Predicated region
    $region10: #{_forward_impl.1} parent=1 // pred_check
      _
    $region11: #{_forward_impl.1} parent=1 // pred_check_branch
      %42 = sbr.rel (0) target = $region13
    $region12: #{_forward_impl.1} parent=1 // pred_region
      _
    $region13: #{_forward_impl.1} parent=1 // pred_fallthru
      _
    // Predicated region
    $region14: #{_forward_impl.1} parent=1 // pred_check
      _
    $region15: #{_forward_impl.1} parent=1 // pred_check_branch
      %44 = sbr.rel (0) target = $region17
    $region16: #{_forward_impl.1} parent=1 // pred_region
      %46 = vsyncadd [#allocation6], 0
      %s47 = sshll.u32 %s3, 4
      %s48 = int_to_ptr.hbm [resolvable:$true] %s47
      %s49 = sshll.u32 [#allocation5], 4
      %s50 = int_to_ptr.vmem [resolvable:$true] %s49
      %55 = dma.hbm_to_vmem [thread:$0]  %s48, 1024, %s50, [#allocation6], 64, 64, 4
    $region17: #{_forward_impl.1} parent=1 // pred_fallthru
      _
    // Predicated region
    $region18: #{_forward_impl.1} parent=1 // pred_check
      _
    $region19: #{_forward_impl.1} parent=1 // pred_check_branch
      %57 = sbr.rel (0) target = $region21
    $region20: #{_forward_impl.1} parent=1 // pred_region
      _
    $region21: #{_forward_impl.1} parent=1 // pred_fallthru
      _
    // Predicated region
    $region22: #{_forward_impl.1} parent=1 // pred_check
      _
    $region23: #{_forward_impl.1} parent=1 // pred_check_branch
      %59 = sbr.rel (0) target = $region25
    $region24: #{_forward_impl.1} parent=1 // pred_region
      %61 = vsyncadd [#allocation6], 0
      %s62 = sshll.u32 %s5, 4
      %s63 = int_to_ptr.hbm [resolvable:$true] %s62
      %s64 = sshll.u32 [#allocation7], 4
      %s65 = int_to_ptr.vmem [resolvable:$true] %s64
      %70 = dma.hbm_to_vmem [thread:$0]  %s63, 1024, %s65, [#allocation6], 64, 64, 4
    $region25: #{_forward_impl.1} parent=1 // pred_fallthru
      _
    // Predicated region
    $region26: #{_forward_impl.1} parent=1 // pred_check
      _
    $region27: #{_forward_impl.1} parent=1 // pred_check_branch
      %72 = sbr.rel (0) target = $region29
    $region28: #{_forward_impl.1} parent=1 // pred_region
      _
    $region29: #{_forward_impl.1} parent=1 // pred_fallthru
      _
    // Predicated region
    $region30: #{_forward_impl.1} parent=1 // pred_check
      _
    $region31: #{_forward_impl.1} parent=1 // pred_check_branch
      %74 = sbr.rel (0) target = $region33
    $region32: #{_forward_impl.1} parent=1 // pred_region
      %76 = vsyncadd [#allocation9], 0
      %s77 = sshll.u32 %s7, 4
      %s78 = int_to_ptr.hbm [resolvable:$true] %s77
      %s79 = sshll.u32 [#allocation8], 4
      %s80 = int_to_ptr.vmem [resolvable:$true] %s79
      %85 = dma.hbm_to_vmem [thread:$0]  %s78, 1024, %s80, [#allocation9], 64, 64, 4
    $region33: #{_forward_impl.1} parent=1 // pred_fallthru
      _
    // Predicated region
    $region34: #{_forward_impl.1} parent=1 // pred_check
      _
    $region35: #{_forward_impl.1} parent=1 // pred_check_branch
      %87 = sbr.rel (0) target = $region37
    $region36: #{_forward_impl.1} parent=1 // pred_region
      _
    $region37: #{_forward_impl.1} parent=1 // pred_fallthru
      _
    // Predicated region
    $region38: #{_forward_impl.1} parent=1 // pred_check
      _
    $region39: #{_forward_impl.1} parent=1 // pred_check_branch
      %89 = sbr.rel (0) target = $region41
    $region40: #{_forward_impl.1} parent=1 // pred_region
      %91 = vsyncadd [#allocation9], 0
      %s92 = sshll.u32 %s9, 4
      %s93 = int_to_ptr.hbm [resolvable:$true] %s92
      %s94 = sshll.u32 [#allocation10], 4
      %s95 = int_to_ptr.vmem [resolvable:$true] %s94
      %100 = dma.hbm_to_vmem [thread:$0]  %s93, 1024, %s95, [#allocation9], 64, 64, 4
    $region41: #{_forward_impl.1} parent=1 // pred_fallthru
      _
    // Predicated region
    $region42: #{_forward_impl.1} parent=1 // pred_check
      _
    $region43: #{_forward_impl.1} parent=1 // pred_check_branch
      %102 = sbr.rel (0) target = $region45
    $region44: #{_forward_impl.1} parent=1 // pred_region
      _
    $region45: #{_forward_impl.1} parent=1 // pred_fallthru
      _
    // Predicated region
    $region46: #{_forward_impl.1} parent=1 // pred_check
      _
    $region47: #{_forward_impl.1} parent=1 // pred_check_branch
      %104 = sbr.rel (0) target = $region49
    $region48: #{_forward_impl.1} parent=1 // pred_region
      %106 = vsyncadd [#allocation12], 0
      %s107 = sshll.u32 %s11, 4
      %s108 = int_to_ptr.hbm [resolvable:$true] %s107
      %s109 = sshll.u32 [#allocation11], 4
      %s110 = int_to_ptr.vmem [resolvable:$true] %s109
      %115 = dma.hbm_to_vmem [thread:$0]  %s108, 1024, %s110, [#allocation12], 64, 64, 4
    $region49: #{_forward_impl.1} parent=1 // pred_fallthru
      _
    // Predicated region
    $region50: #{_forward_impl.1} parent=1 // pred_check
      _
    $region51: #{_forward_impl.1} parent=1 // pred_check_branch
      %117 = sbr.rel (0) target = $region53
    $region52: #{_forward_impl.1} parent=1 // pred_region
      _
    $region53: #{_forward_impl.1} parent=1 // pred_fallthru
      _
    // Predicated region
    $region54: #{_forward_impl.1} parent=1 // pred_check
      _
    $region55: #{_forward_impl.1} parent=1 // pred_check_branch
      %119 = sbr.rel (0) target = $region57
    $region56: #{_forward_impl.1} parent=1 // pred_region
      %121 = dma.done [#allocation3], 1024
    $region57: #{_forward_impl.1} parent=1 // pred_fallthru
      _
    // Predicated region
    $region58: #{_forward_impl.1} parent=1 // pred_check
      _
    $region59: #{_forward_impl.1} parent=1 // pred_check_branch
      %123 = sbr.rel (0) target = $region61
    $region60: #{_forward_impl.1} parent=1 // pred_region
      %125 = dma.done [#allocation6], 1024
    $region61: #{_forward_impl.1} parent=1 // pred_fallthru
      _
    // Predicated region
    $region62: #{_forward_impl.1} parent=1 // pred_check
      _
    $region63: #{_forward_impl.1} parent=1 // pred_check_branch
      %127 = sbr.rel (0) target = $region65
    $region64: #{_forward_impl.1} parent=1 // pred_region
      %129 = dma.done [#allocation6], 1024
    $region65: #{_forward_impl.1} parent=1 // pred_fallthru
      _
    // Predicated region
    $region66: #{_forward_impl.1} parent=1 // pred_check
      _
    $region67: #{_forward_impl.1} parent=1 // pred_check_branch
      %131 = sbr.rel (0) target = $region69
    $region68: #{_forward_impl.1} parent=1 // pred_region
      %133 = dma.done [#allocation9], 1024
    $region69: #{_forward_impl.1} parent=1 // pred_fallthru
      _
    // Predicated region
    $region70: #{_forward_impl.1} parent=1 // pred_check
      _
    $region71: #{_forward_impl.1} parent=1 // pred_check_branch
      %135 = sbr.rel (0) target = $region73
    $region72: #{_forward_impl.1} parent=1 // pred_region
      %137 = dma.done [#allocation9], 1024
    $region73: #{_forward_impl.1} parent=1 // pred_fallthru
      _
    // Predicated region
    $region74: #{_forward_impl.1} parent=1 // pred_check
      _
    $region75: #{_forward_impl.1} parent=1 // pred_check_branch
      %139 = sbr.rel (0) target = $region77
    $region76: #{_forward_impl.1} parent=1 // pred_region
      %141 = dma.done [#allocation12], 1024
    $region77: #{_forward_impl.1} parent=1 // pred_fallthru
      _
    %v142 = vld [vmem:[%s0] sm:$0xf]
    %v143 = vld [vmem:[#allocation2] sm:$0xf]
    %v144 = vld [vmem:[#allocation2 + $0x4] sm:$0xf]
    %v145 = vld [vmem:[#allocation2 + $0x8] sm:$0xf]
    %v146 = vld [vmem:[#allocation2 + $0xc] sm:$0xf]
    %v147 = vld [vmem:[#allocation2 + $0x10] sm:$0xf]
    %v148 = vld [vmem:[#allocation2 + $0x14] sm:$0xf]
    %v149 = vld [vmem:[#allocation2 + $0x18] sm:$0xf]
    %v150 = vld [vmem:[#allocation2 + $0x1c] sm:$0xf]
    %v151 = vld [vmem:[#allocation2 + $0x20] sm:$0xf]
    %v152 = vld [vmem:[#allocation2 + $0x24] sm:$0xf]
    %v153 = vld [vmem:[#allocation2 + $0x28] sm:$0xf]
    %v154 = vld [vmem:[#allocation2 + $0x2c] sm:$0xf]
    %v155 = vld [vmem:[#allocation2 + $0x30] sm:$0xf]
    %v156 = vld [vmem:[#allocation2 + $0x34] sm:$0xf]
    %v157 = vld [vmem:[#allocation2 + $0x38] sm:$0xf]
    %v158 = vld [vmem:[#allocation2 + $0x3c] sm:$0xf]
    %v159 = vld [vmem:[%s2] sm:$0x1]
    %v161 = vperm.slane %v159, 0
    %v179 = vunpack.c.l.b16 %v143
    %v180 = vunpack.c.l.b16 %v144
    %v181 = vunpack.c.l.b16 %v145
    %v182 = vunpack.c.l.b16 %v146
    %v183 = vunpack.c.l.b16 %v147
    %v184 = vunpack.c.l.b16 %v148
    %v185 = vunpack.c.l.b16 %v149
    %v186 = vunpack.c.l.b16 %v150
    %v187 = vunpack.c.l.b16 %v151
    %v188 = vunpack.c.l.b16 %v152
    %v189 = vunpack.c.l.b16 %v153
    %v190 = vunpack.c.l.b16 %v154
    %v191 = vunpack.c.l.b16 %v155
    %v192 = vunpack.c.l.b16 %v156
    %v193 = vunpack.c.l.b16 %v157
    %v194 = vunpack.c.l.b16 %v158
    %v195 = vpack.c.b16 %v180, %v179
    %v196 = vpack.c.b16 %v182, %v181
    %v197 = vpack.c.b16 %v184, %v183
    %v198 = vpack.c.b16 %v186, %v185
    %v199 = vpack.c.b16 %v188, %v187
    %v200 = vpack.c.b16 %v190, %v189
    %v201 = vpack.c.b16 %v192, %v191
    %v202 = vpack.c.b16 %v194, %v193
    %211 = vmatpush.bf16.msra.mxu0 %v202
    %212 = vmatpush.bf16.msra.mxu0 %v201
    %213 = vmatpush.bf16.msra.mxu0 %v200
    %214 = vmatpush.bf16.msra.mxu0 %v199
    %215 = vmatpush.bf16.msra.mxu0 %v198
    %216 = vmatpush.bf16.msra.mxu0 %v197
    %217 = vmatpush.bf16.msra.mxu0 %v196
    %218 = vmatpush.bf16.msra.mxu0 %v195
    %219 = vmatmul.bf16.gmra.mxu0 %v142
    %v220 = vpop.f32.mrf.mxu0
    %v221 = vadd.f32 %v161, %v220
    %v222 = vpop.f32.mrf.mxu0
    %223 = vdwg.mxu0
    %v224 = vpack.c.bf16 %v221, %v221
    %v225 = vunpack.c.l.bf16 %v224
    %vm226 = vcmp.gt.f32.partialorder %v225, 0.0
    %v227 = vmul.f32 %v225, 1.442695
    %v228 = vpow.pop %v227
    %v229 = vpack.c.bf16 %v228, %v228
    %v230 = vunpack.c.l.bf16 %v229
    %v231 = vsub.f32 %v230, 1.0
    %v232 = vpack.c.bf16 %v231, %v231
    %v233 = vunpack.c.l.bf16 %v232
    %v234 = vmul.f32 %v233, 1.671875
    %v235 = vpack.c.bf16 %v234, %v234
    %vm236 = vmpackc.low %vm226, %vm226
    %v237 = vsel %vm236, %v224, %v235
    %v238 = vunpack.c.l.bf16 %v237
    %v239 = vmul.f32 %v238, 1.046875
    %v240 = vpack.c.bf16 %v239, %v239
    %v241 = vld [vmem:[#allocation5] sm:$0xf]
    %v242 = vld [vmem:[#allocation5 + $0x4] sm:$0xf]
    %v243 = vld [vmem:[#allocation5 + $0x8] sm:$0xf]
    %v244 = vld [vmem:[#allocation5 + $0xc] sm:$0xf]
    %v245 = vld [vmem:[#allocation5 + $0x10] sm:$0xf]
    %v246 = vld [vmem:[#allocation5 + $0x14] sm:$0xf]
    %v247 = vld [vmem:[#allocation5 + $0x18] sm:$0xf]
    %v248 = vld [vmem:[#allocation5 + $0x1c] sm:$0xf]
    %v249 = vld [vmem:[#allocation5 + $0x20] sm:$0xf]
    %v250 = vld [vmem:[#allocation5 + $0x24] sm:$0xf]
    %v251 = vld [vmem:[#allocation5 + $0x28] sm:$0xf]
    %v252 = vld [vmem:[#allocation5 + $0x2c] sm:$0xf]
    %v253 = vld [vmem:[#allocation5 + $0x30] sm:$0xf]
    %v254 = vld [vmem:[#allocation5 + $0x34] sm:$0xf]
    %v255 = vld [vmem:[#allocation5 + $0x38] sm:$0xf]
    %v256 = vld [vmem:[#allocation5 + $0x3c] sm:$0xf]
    %v257 = vld [vmem:[%s4] sm:$0x1]
    %v259 = vperm.slane %v257, 0
    %v277 = vunpack.c.l.b16 %v241
    %v278 = vunpack.c.l.b16 %v242
    %v279 = vunpack.c.l.b16 %v243
    %v280 = vunpack.c.l.b16 %v244
    %v281 = vunpack.c.l.b16 %v245
    %v282 = vunpack.c.l.b16 %v246
    %v283 = vunpack.c.l.b16 %v247
    %v284 = vunpack.c.l.b16 %v248
    %v285 = vunpack.c.l.b16 %v249
    %v286 = vunpack.c.l.b16 %v250
    %v287 = vunpack.c.l.b16 %v251
    %v288 = vunpack.c.l.b16 %v252
    %v289 = vunpack.c.l.b16 %v253
    %v290 = vunpack.c.l.b16 %v254
    %v291 = vunpack.c.l.b16 %v255
    %v292 = vunpack.c.l.b16 %v256
    %v293 = vpack.c.b16 %v278, %v277
    %v294 = vpack.c.b16 %v280, %v279
    %v295 = vpack.c.b16 %v282, %v281
    %v296 = vpack.c.b16 %v284, %v283
    %v297 = vpack.c.b16 %v286, %v285
    %v298 = vpack.c.b16 %v288, %v287
    %v299 = vpack.c.b16 %v290, %v289
    %v300 = vpack.c.b16 %v292, %v291
    %309 = vmatpush.bf16.msra.mxu0 %v300
    %310 = vmatpush.bf16.msra.mxu0 %v299
    %311 = vmatpush.bf16.msra.mxu0 %v298
    %312 = vmatpush.bf16.msra.mxu0 %v297
    %313 = vmatpush.bf16.msra.mxu0 %v296
    %314 = vmatpush.bf16.msra.mxu0 %v295
    %315 = vmatpush.bf16.msra.mxu0 %v294
    %316 = vmatpush.bf16.msra.mxu0 %v293
    %317 = vmatmul.bf16.gmra.mxu0 %v240
    %v318 = vpop.f32.mrf.mxu0
    %v319 = vadd.f32 %v259, %v318
    %v320 = vpop.f32.mrf.mxu0
    %321 = vdwg.mxu0
    %v322 = vpack.c.bf16 %v319, %v319
    %v323 = vunpack.c.l.bf16 %v322
    %vm324 = vcmp.gt.f32.partialorder %v323, 0.0
    %v325 = vmul.f32 %v323, 1.442695
    %v326 = vpow.pop %v325
    %v327 = vpack.c.bf16 %v326, %v326
    %v328 = vunpack.c.l.bf16 %v327
    %v329 = vsub.f32 %v328, 1.0
    %v330 = vpack.c.bf16 %v329, %v329
    %v331 = vunpack.c.l.bf16 %v330
    %v332 = vmul.f32 %v331, 1.671875
    %v333 = vpack.c.bf16 %v332, %v332
    %vm334 = vmpackc.low %vm324, %vm324
    %v335 = vsel %vm334, %v322, %v333
    %v336 = vunpack.c.l.bf16 %v335
    %v337 = vmul.f32 %v336, 1.046875
    %v338 = vpack.c.bf16 %v337, %v337
    %v339 = vld [vmem:[#allocation7] sm:$0xf]
    %v340 = vld [vmem:[#allocation7 + $0x4] sm:$0xf]
    %v341 = vld [vmem:[#allocation7 + $0x8] sm:$0xf]
    %v342 = vld [vmem:[#allocation7 + $0xc] sm:$0xf]
    %v343 = vld [vmem:[#allocation7 + $0x10] sm:$0xf]
    %v344 = vld [vmem:[#allocation7 + $0x14] sm:$0xf]
    %v345 = vld [vmem:[#allocation7 + $0x18] sm:$0xf]
    %v346 = vld [vmem:[#allocation7 + $0x1c] sm:$0xf]
    %v347 = vld [vmem:[#allocation7 + $0x20] sm:$0xf]
    %v348 = vld [vmem:[#allocation7 + $0x24] sm:$0xf]
    %v349 = vld [vmem:[#allocation7 + $0x28] sm:$0xf]
    %v350 = vld [vmem:[#allocation7 + $0x2c] sm:$0xf]
    %v351 = vld [vmem:[#allocation7 + $0x30] sm:$0xf]
    %v352 = vld [vmem:[#allocation7 + $0x34] sm:$0xf]
    %v353 = vld [vmem:[#allocation7 + $0x38] sm:$0xf]
    %v354 = vld [vmem:[#allocation7 + $0x3c] sm:$0xf]
    %v355 = vld [vmem:[%s6] sm:$0x1]
    %v357 = vperm.slane %v355, 0
    %v375 = vunpack.c.l.b16 %v339
    %v376 = vunpack.c.l.b16 %v340
    %v377 = vunpack.c.l.b16 %v341
    %v378 = vunpack.c.l.b16 %v342
    %v379 = vunpack.c.l.b16 %v343
    %v380 = vunpack.c.l.b16 %v344
    %v381 = vunpack.c.l.b16 %v345
    %v382 = vunpack.c.l.b16 %v346
    %v383 = vunpack.c.l.b16 %v347
    %v384 = vunpack.c.l.b16 %v348
    %v385 = vunpack.c.l.b16 %v349
    %v386 = vunpack.c.l.b16 %v350
    %v387 = vunpack.c.l.b16 %v351
    %v388 = vunpack.c.l.b16 %v352
    %v389 = vunpack.c.l.b16 %v353
    %v390 = vunpack.c.l.b16 %v354
    %v391 = vpack.c.b16 %v376, %v375
    %v392 = vpack.c.b16 %v378, %v377
    %v393 = vpack.c.b16 %v380, %v379
    %v394 = vpack.c.b16 %v382, %v381
    %v395 = vpack.c.b16 %v384, %v383
    %v396 = vpack.c.b16 %v386, %v385
    %v397 = vpack.c.b16 %v388, %v387
    %v398 = vpack.c.b16 %v390, %v389
    %407 = vmatpush.bf16.msra.mxu0 %v398
    %408 = vmatpush.bf16.msra.mxu0 %v397
    %409 = vmatpush.bf16.msra.mxu0 %v396
    %410 = vmatpush.bf16.msra.mxu0 %v395
    %411 = vmatpush.bf16.msra.mxu0 %v394
    %412 = vmatpush.bf16.msra.mxu0 %v393
    %413 = vmatpush.bf16.msra.mxu0 %v392
    %414 = vmatpush.bf16.msra.mxu0 %v391
    %415 = vmatmul.bf16.gmra.mxu0 %v338
    %v416 = vpop.f32.mrf.mxu0
    %v417 = vadd.f32 %v357, %v416
    %v418 = vpop.f32.mrf.mxu0
    %419 = vdwg.mxu0
    %v420 = vpack.c.bf16 %v417, %v417
    %421 = vst [vmem:[#allocation14] sm:$0xf] %v420
    %v422 = vld [vmem:[#allocation8] sm:$0xf]
    %v423 = vld [vmem:[#allocation8 + $0x4] sm:$0xf]
    %v424 = vld [vmem:[#allocation8 + $0x8] sm:$0xf]
    %v425 = vld [vmem:[#allocation8 + $0xc] sm:$0xf]
    %v426 = vld [vmem:[#allocation8 + $0x10] sm:$0xf]
    %v427 = vld [vmem:[#allocation8 + $0x14] sm:$0xf]
    %v428 = vld [vmem:[#allocation8 + $0x18] sm:$0xf]
    %v429 = vld [vmem:[#allocation8 + $0x1c] sm:$0xf]
    %v430 = vld [vmem:[#allocation8 + $0x20] sm:$0xf]
    %v431 = vld [vmem:[#allocation8 + $0x24] sm:$0xf]
    %v432 = vld [vmem:[#allocation8 + $0x28] sm:$0xf]
    %v433 = vld [vmem:[#allocation8 + $0x2c] sm:$0xf]
    %v434 = vld [vmem:[#allocation8 + $0x30] sm:$0xf]
    %v435 = vld [vmem:[#allocation8 + $0x34] sm:$0xf]
    %v436 = vld [vmem:[#allocation8 + $0x38] sm:$0xf]
    %v437 = vld [vmem:[#allocation8 + $0x3c] sm:$0xf]
    %v438 = vld [vmem:[%s8] sm:$0x1]
    %v440 = vperm.slane %v438, 0
    %v458 = vunpack.c.l.b16 %v422
    %v459 = vunpack.c.l.b16 %v423
    %v460 = vunpack.c.l.b16 %v424
    %v461 = vunpack.c.l.b16 %v425
    %v462 = vunpack.c.l.b16 %v426
    %v463 = vunpack.c.l.b16 %v427
    %v464 = vunpack.c.l.b16 %v428
    %v465 = vunpack.c.l.b16 %v429
    %v466 = vunpack.c.l.b16 %v430
    %v467 = vunpack.c.l.b16 %v431
    %v468 = vunpack.c.l.b16 %v432
    %v469 = vunpack.c.l.b16 %v433
    %v470 = vunpack.c.l.b16 %v434
    %v471 = vunpack.c.l.b16 %v435
    %v472 = vunpack.c.l.b16 %v436
    %v473 = vunpack.c.l.b16 %v437
    %v474 = vpack.c.b16 %v459, %v458
    %v475 = vpack.c.b16 %v461, %v460
    %v476 = vpack.c.b16 %v463, %v462
    %v477 = vpack.c.b16 %v465, %v464
    %v478 = vpack.c.b16 %v467, %v466
    %v479 = vpack.c.b16 %v469, %v468
    %v480 = vpack.c.b16 %v471, %v470
    %v481 = vpack.c.b16 %v473, %v472
    %490 = vmatpush.bf16.msra.mxu0 %v481
    %491 = vmatpush.bf16.msra.mxu0 %v480
    %492 = vmatpush.bf16.msra.mxu0 %v479
    %493 = vmatpush.bf16.msra.mxu0 %v478
    %494 = vmatpush.bf16.msra.mxu0 %v477
    %495 = vmatpush.bf16.msra.mxu0 %v476
    %496 = vmatpush.bf16.msra.mxu0 %v475
    %497 = vmatpush.bf16.msra.mxu0 %v474
    %498 = vmatmul.bf16.gmra.mxu0 %v420
    %v499 = vpop.f32.mrf.mxu0
    %v500 = vadd.f32 %v440, %v499
    %v501 = vpop.f32.mrf.mxu0
    %502 = vdwg.mxu0
    %v503 = vpack.c.bf16 %v500, %v500
    %v504 = vunpack.c.l.bf16 %v503
    %vm505 = vcmp.gt.f32.partialorder %v504, 0.0
    %v506 = vmul.f32 %v504, 1.442695
    %v507 = vpow.pop %v506
    %v508 = vpack.c.bf16 %v507, %v507
    %v509 = vunpack.c.l.bf16 %v508
    %v510 = vsub.f32 %v509, 1.0
    %v511 = vpack.c.bf16 %v510, %v510
    %v512 = vunpack.c.l.bf16 %v511
    %v513 = vmul.f32 %v512, 1.671875
    %v514 = vpack.c.bf16 %v513, %v513
    %vm515 = vmpackc.low %vm505, %vm505
    %v516 = vsel %vm515, %v503, %v514
    %v517 = vunpack.c.l.bf16 %v516
    %v518 = vmul.f32 %v517, 1.046875
    %v519 = vpack.c.bf16 %v518, %v518
    %v520 = vld [vmem:[#allocation10] sm:$0xf]
    %v521 = vld [vmem:[#allocation10 + $0x4] sm:$0xf]
    %v522 = vld [vmem:[#allocation10 + $0x8] sm:$0xf]
    %v523 = vld [vmem:[#allocation10 + $0xc] sm:$0xf]
    %v524 = vld [vmem:[#allocation10 + $0x10] sm:$0xf]
    %v525 = vld [vmem:[#allocation10 + $0x14] sm:$0xf]
    %v526 = vld [vmem:[#allocation10 + $0x18] sm:$0xf]
    %v527 = vld [vmem:[#allocation10 + $0x1c] sm:$0xf]
    %v528 = vld [vmem:[#allocation10 + $0x20] sm:$0xf]
    %v529 = vld [vmem:[#allocation10 + $0x24] sm:$0xf]
    %v530 = vld [vmem:[#allocation10 + $0x28] sm:$0xf]
    %v531 = vld [vmem:[#allocation10 + $0x2c] sm:$0xf]
    %v532 = vld [vmem:[#allocation10 + $0x30] sm:$0xf]
    %v533 = vld [vmem:[#allocation10 + $0x34] sm:$0xf]
    %v534 = vld [vmem:[#allocation10 + $0x38] sm:$0xf]
    %v535 = vld [vmem:[#allocation10 + $0x3c] sm:$0xf]
    %v536 = vld [vmem:[%s10] sm:$0x1]
    %v538 = vperm.slane %v536, 0
    %v556 = vunpack.c.l.b16 %v520
    %v557 = vunpack.c.l.b16 %v521
    %v558 = vunpack.c.l.b16 %v522
    %v559 = vunpack.c.l.b16 %v523
    %v560 = vunpack.c.l.b16 %v524
    %v561 = vunpack.c.l.b16 %v525
    %v562 = vunpack.c.l.b16 %v526
    %v563 = vunpack.c.l.b16 %v527
    %v564 = vunpack.c.l.b16 %v528
    %v565 = vunpack.c.l.b16 %v529
    %v566 = vunpack.c.l.b16 %v530
    %v567 = vunpack.c.l.b16 %v531
    %v568 = vunpack.c.l.b16 %v532
    %v569 = vunpack.c.l.b16 %v533
    %v570 = vunpack.c.l.b16 %v534
    %v571 = vunpack.c.l.b16 %v535
    %v572 = vpack.c.b16 %v557, %v556
    %v573 = vpack.c.b16 %v559, %v558
    %v574 = vpack.c.b16 %v561, %v560
    %v575 = vpack.c.b16 %v563, %v562
    %v576 = vpack.c.b16 %v565, %v564
    %v577 = vpack.c.b16 %v567, %v566
    %v578 = vpack.c.b16 %v569, %v568
    %v579 = vpack.c.b16 %v571, %v570
    %588 = vmatpush.bf16.msra.mxu0 %v579
    %589 = vmatpush.bf16.msra.mxu0 %v578
    %590 = vmatpush.bf16.msra.mxu0 %v577
    %591 = vmatpush.bf16.msra.mxu0 %v576
    %592 = vmatpush.bf16.msra.mxu0 %v575
    %593 = vmatpush.bf16.msra.mxu0 %v574
    %594 = vmatpush.bf16.msra.mxu0 %v573
    %595 = vmatpush.bf16.msra.mxu0 %v572
    %596 = vmatmul.bf16.gmra.mxu0 %v519
    %v597 = vpop.f32.mrf.mxu0
    %v598 = vadd.f32 %v538, %v597
    %v599 = vpop.f32.mrf.mxu0
    %600 = vdwg.mxu0
    %v601 = vpack.c.bf16 %v598, %v598
    %v602 = vunpack.c.l.bf16 %v601
    %vm603 = vcmp.gt.f32.partialorder %v602, 0.0
    %v604 = vmul.f32 %v602, 1.442695
    %v605 = vpow.pop %v604
    %v606 = vpack.c.bf16 %v605, %v605
    %v607 = vunpack.c.l.bf16 %v606
    %v608 = vsub.f32 %v607, 1.0
    %v609 = vpack.c.bf16 %v608, %v608
    %v610 = vunpack.c.l.bf16 %v609
    %v611 = vmul.f32 %v610, 1.671875
    %v612 = vpack.c.bf16 %v611, %v611
    %vm613 = vmpackc.low %vm603, %vm603
    %v614 = vsel %vm613, %v601, %v612
    %v615 = vunpack.c.l.bf16 %v614
    %v616 = vmul.f32 %v615, 1.046875
    %v617 = vpack.c.bf16 %v616, %v616
    %v618 = vld [vmem:[#allocation11] sm:$0xf]
    %v619 = vld [vmem:[#allocation11 + $0x4] sm:$0xf]
    %v620 = vld [vmem:[#allocation11 + $0x8] sm:$0xf]
    %v621 = vld [vmem:[#allocation11 + $0xc] sm:$0xf]
    %v622 = vld [vmem:[#allocation11 + $0x10] sm:$0xf]
    %v623 = vld [vmem:[#allocation11 + $0x14] sm:$0xf]
    %v624 = vld [vmem:[#allocation11 + $0x18] sm:$0xf]
    %v625 = vld [vmem:[#allocation11 + $0x1c] sm:$0xf]
    %v626 = vld [vmem:[#allocation11 + $0x20] sm:$0xf]
    %v627 = vld [vmem:[#allocation11 + $0x24] sm:$0xf]
    %v628 = vld [vmem:[#allocation11 + $0x28] sm:$0xf]
    %v629 = vld [vmem:[#allocation11 + $0x2c] sm:$0xf]
    %v630 = vld [vmem:[#allocation11 + $0x30] sm:$0xf]
    %v631 = vld [vmem:[#allocation11 + $0x34] sm:$0xf]
    %v632 = vld [vmem:[#allocation11 + $0x38] sm:$0xf]
    %v633 = vld [vmem:[#allocation11 + $0x3c] sm:$0xf]
    %v634 = vld [vmem:[%s12] sm:$0x1]
    %v636 = vperm.slane %v634, 0
    %v654 = vunpack.c.l.b16 %v618
    %v655 = vunpack.c.l.b16 %v619
    %v656 = vunpack.c.l.b16 %v620
    %v657 = vunpack.c.l.b16 %v621
    %v658 = vunpack.c.l.b16 %v622
    %v659 = vunpack.c.l.b16 %v623
    %v660 = vunpack.c.l.b16 %v624
    %v661 = vunpack.c.l.b16 %v625
    %v662 = vunpack.c.l.b16 %v626
    %v663 = vunpack.c.l.b16 %v627
    %v664 = vunpack.c.l.b16 %v628
    %v665 = vunpack.c.l.b16 %v629
    %v666 = vunpack.c.l.b16 %v630
    %v667 = vunpack.c.l.b16 %v631
    %v668 = vunpack.c.l.b16 %v632
    %v669 = vunpack.c.l.b16 %v633
    %v670 = vpack.c.b16 %v655, %v654
    %v671 = vpack.c.b16 %v657, %v656
    %v672 = vpack.c.b16 %v659, %v658
    %v673 = vpack.c.b16 %v661, %v660
    %v674 = vpack.c.b16 %v663, %v662
    %v675 = vpack.c.b16 %v665, %v664
    %v676 = vpack.c.b16 %v667, %v666
    %v677 = vpack.c.b16 %v669, %v668
    %686 = vmatpush.bf16.msra.mxu0 %v677
    %687 = vmatpush.bf16.msra.mxu0 %v676
    %688 = vmatpush.bf16.msra.mxu0 %v675
    %689 = vmatpush.bf16.msra.mxu0 %v674
    %690 = vmatpush.bf16.msra.mxu0 %v673
    %691 = vmatpush.bf16.msra.mxu0 %v672
    %692 = vmatpush.bf16.msra.mxu0 %v671
    %693 = vmatpush.bf16.msra.mxu0 %v670
    %694 = vmatmul.bf16.gmra.mxu0 %v617
    %v695 = vpop.f32.mrf.mxu0
    %v696 = vadd.f32 %v636, %v695
    %v697 = vpop.f32.mrf.mxu0
    %698 = vdwg.mxu0
    %v699 = vsub.f32 0.0, %v696
    %v700 = vmul.f32 %v699, 1.442695
    %v701 = vpow.pop %v700
    %v702 = vadd.f32 %v701, 1.0
    %v703 = vrcp.pop %v702
    %v704 = vpack.c.bf16 %v703, %v703
    %705 = vst [vmem:[#allocation13] sm:$0xf] %v704
    // Predicated region
    $region78: #{_forward_impl.1} parent=1 // pred_check
      _
    $region79: #{_forward_impl.1} parent=1 // pred_check_branch
      %707 = sbr.rel (0) target = $region81
    $region80: #{_forward_impl.1} parent=1 // pred_region
      %709 = vsyncadd [#allocation4], 0
      %s711 = sshll.u32 [#allocation13], 4
      %s712 = int_to_ptr.vmem [resolvable:$true] %s711
      %s713 = sshll.u32 %s13, 4
      %s714 = int_to_ptr.hbm [resolvable:$true] %s713
      %716 = dma.vmem_to_hbm [thread:$0]  %s712, 64, %s714, [#allocation4]
    $region81: #{_forward_impl.1} parent=1 // pred_fallthru
      _
    // Predicated region
    $region82: #{_forward_impl.1} parent=1 // pred_check
      _
    $region83: #{_forward_impl.1} parent=1 // pred_check_branch
      %718 = sbr.rel (0) target = $region85
    $region84: #{_forward_impl.1} parent=1 // pred_region
      %720 = vsyncadd [#allocation15], 0
      %s722 = sshll.u32 [#allocation14], 4
      %s723 = int_to_ptr.vmem [resolvable:$true] %s722
      %s724 = sshll.u32 %s14, 4
      %s725 = int_to_ptr.hbm [resolvable:$true] %s724
      %727 = dma.vmem_to_hbm [thread:$0]  %s723, 64, %s725, [#allocation15]
    $region85: #{_forward_impl.1} parent=1 // pred_fallthru
      _
    // Predicated region
    $region86: #{_forward_impl.1} parent=1 // pred_check
      _
    $region87: #{_forward_impl.1} parent=1 // pred_check_branch
      %729 = sbr.rel (0) target = $region89
    $region88: #{_forward_impl.1} parent=1 // pred_region
      %731 = dma.done [#allocation4], 64
    $region89: #{_forward_impl.1} parent=1 // pred_fallthru
      _
    // Predicated region
    $region90: #{_forward_impl.1} parent=1 // pred_check
      _
    $region91: #{_forward_impl.1} parent=1 // pred_check_branch
      %733 = sbr.rel (0) target = $region93
    $region92: #{_forward_impl.1} parent=1 // pred_region
      %735 = dma.done [#allocation15], 64
    $region93: #{_forward_impl.1} parent=1 // pred_fallthru
      _
    %736 = vsyncpa [#allocation3], 1
    %737 = vsyncpa [#allocation6], 1
    %738 = vsyncpa [#allocation9], 1
    %739 = vsyncpa [#allocation12], 1
    %740 = vsyncpa [#allocation4], 1
    %741 = vsyncpa [#allocation15], 1

</llo_original>
